<compile_context>
chip_gen: v5e
topology: v5e:2x2
jax: 0.10.0
libtpu: 0.0.40
codegen_flags: <defaults>
</compile_context>

<pallas_src>
import jax
import jax.numpy as jnp
import numpy as np
from jax import lax
from jax.experimental import pallas as pl
from jax.experimental.pallas import tpu as pltpu


def _round_up(v, m):
    return (v + m - 1) // m * m


def _pad2(a, rows, cols):
    return jnp.pad(a, ((0, rows - a.shape[0]), (0, cols - a.shape[1])))


# --------------------- resident variant (no grid, fori_loop) -----------------
def gin_resident_kernel(adj_ref, x_ref, pw_ref, pb_ref,
                        w1_ref, b1_ref, w2_ref, b2_ref,
                        pool_ref, fcw_ref, fcb_ref, out_ref):
    """All operands resident in VMEM once; the layer loop runs in-kernel."""
    num_layers = w1_ref.shape[0]

    # Input projection (bf16 operands, f32 MXU accumulation).
    h0 = (jnp.dot(x_ref[...], pw_ref[...], preferred_element_type=jnp.float32)
          + pb_ref[...]).astype(jnp.bfloat16)

    def layer(l, h):
        # GIN aggregation: (A + (1+eps) I) @ h   (self-loop baked into adj).
        agg = jnp.dot(adj_ref[...], h, preferred_element_type=jnp.float32)
        z = jnp.dot(agg.astype(jnp.bfloat16), w1_ref[l],
                    preferred_element_type=jnp.float32) + b1_ref[l]
        z = jnp.maximum(z, 0.0)
        z = jnp.dot(z.astype(jnp.bfloat16), w2_ref[l],
                    preferred_element_type=jnp.float32) + b2_ref[l]
        # mlp trailing ReLU; the module's outer ReLU is a no-op after it.
        return jnp.maximum(z, 0.0).astype(jnp.bfloat16)

    h = lax.fori_loop(0, num_layers, layer, h0, unroll=True)

    # Fused readout (mean-pool / row-select matrix) + fc, bf16 on the MXU.
    pooled = jnp.dot(pool_ref[...], h, preferred_element_type=jnp.float32)
    out_ref[...] = (jnp.dot(pooled.astype(jnp.bfloat16), fcw_ref[...],
                            preferred_element_type=jnp.float32) + fcb_ref[...])


# --------------------- streamed variant (layer grid axis) --------------------
def gin_streamed_kernel(adj_ref, x_ref, pw_ref, pb_ref,
                        w1_ref, b1_ref, w2_ref, b2_ref,
                        pool_ref, fcw_ref, fcb_ref, out_ref, h_ref):
    """Grid axis 0 = layer.  h_ref: persistent bf16 VMEM scratch [N, H]."""
    l = pl.program_id(0)

    # Input projection once; result kept resident in the bf16 scratch.
    @pl.when(l == 0)
    def _():
        h_ref[...] = (
            jnp.dot(x_ref[...], pw_ref[...], preferred_element_type=jnp.float32)
            + pb_ref[...]).astype(jnp.bfloat16)

    # One GINConv + ReLU per grid step:  h <- relu(mlp((A + (1+eps) I) @ h)).
    agg = jnp.dot(adj_ref[...], h_ref[...], preferred_element_type=jnp.float32)
    z = jnp.dot(agg.astype(jnp.bfloat16), w1_ref[...],
                preferred_element_type=jnp.float32) + b1_ref[...]
    z = jnp.maximum(z, 0.0)
    z = jnp.dot(z.astype(jnp.bfloat16), w2_ref[...],
                preferred_element_type=jnp.float32) + b2_ref[...]
    h_new = jnp.maximum(z, 0.0).astype(jnp.bfloat16)
    h_ref[...] = h_new

    # Constant output index_map: written only on the last step; Pallas defers
    # the HBM writeback until the grid finishes.
    @pl.when(l == pl.num_programs(0) - 1)
    def _():
        pooled = jnp.dot(pool_ref[...], h_new, preferred_element_type=jnp.float32)
        out_ref[...] = (
            jnp.dot(pooled.astype(jnp.bfloat16), fcw_ref[...],
                    preferred_element_type=jnp.float32) + fcb_ref[...])


# ------------------------------ operand prep ---------------------------------
def _prepare_operands(params, x, edge_index, batch, num_graphs, target_idx, eps):
    n, f = x.shape
    h_dim = params["proj_w"].shape[1]
    e_dim = params["fc_w"].shape[1]

    n_pad = _round_up(n, 128)
    f_pad = _round_up(f, 128)
    # Real model has hidden=768 / embedding=512 (multiples of 256 -> full
    # v6e/v7x MXU width); the demo's 128 only half-fills the 256-wide MXU.
    h_pad = _round_up(h_dim, 128)
    e_pad = _round_up(e_dim, 128)

    # Dense GIN aggregation operator adj[dst, src] = #edges + (1+eps) on diag,
    # built with scatter-adds (no eye(n) materialization), cast to bf16.
    adj = jnp.zeros((n, n), jnp.float32)
    adj = adj.at[edge_index[1], edge_index[0]].add(1.0)
    adj = adj.at[jnp.arange(n), jnp.arange(n)].add(1.0 + eps)
    adj = _pad2(adj, n_pad, n_pad).astype(jnp.bfloat16)

    x_p = _pad2(x.astype(jnp.float32), n_pad, f_pad).astype(jnp.bfloat16)
    pw = _pad2(params["proj_w"], f_pad, h_pad).astype(jnp.bfloat16)
    pb = _pad2(params["proj_b"].reshape(1, -1), 1, h_pad).astype(jnp.float32)

    # Stack per-layer MLP weights: [L, H, H] / [L, 1, H].
    w1 = jnp.stack([_pad2(lp["w1"], h_pad, h_pad)
                    for lp in params["layers"]]).astype(jnp.bfloat16)
    b1 = jnp.stack([_pad2(lp["b1"].reshape(1, -1), 1, h_pad)
                    for lp in params["layers"]]).astype(jnp.float32)
    w2 = jnp.stack([_pad2(lp["w2"], h_pad, h_pad)
                    for lp in params["layers"]]).astype(jnp.bfloat16)
    b2 = jnp.stack([_pad2(lp["b2"].reshape(1, -1), 1, h_pad)
                    for lp in params["layers"]]).astype(jnp.float32)

    fcw = _pad2(params["fc_w"], h_pad, e_pad).astype(jnp.bfloat16)
    fcb = _pad2(params["fc_b"].reshape(1, -1), 1, e_pad).astype(jnp.float32)

    # Readout matrix: global_mean_pool (onehot / count) or row selection.
    if target_idx is None:
        onehot = (batch[None, :] == jnp.arange(num_graphs)[:, None]).astype(jnp.float32)
        counts = jnp.maximum(onehot.sum(axis=1, keepdims=True), 1.0)
        readout = onehot / counts
        g = num_graphs
    else:
        tgt = jnp.asarray(target_idx, jnp.int32).reshape(-1)
        g = tgt.shape[0]
        readout = (tgt[:, None] == jnp.arange(n)[None, :]).astype(jnp.float32)
    g_pad = _round_up(g, 8)
    readout = _pad2(readout, g_pad, n_pad).astype(jnp.bfloat16)

    ops = (adj, x_p, pw, pb, w1, b1, w2, b2, readout, fcw, fcb)
    dims = dict(n_pad=n_pad, f_pad=f_pad, h_pad=h_pad, e_pad=e_pad,
                g_pad=g_pad, g=g, e_dim=e_dim, num_layers=len(params["layers"]))
    return ops, dims


# ------------------------------- forward -------------------------------------
def gin_baseline_forward(params, x, edge_index, batch, num_graphs,
                         target_idx=None, eps=0.0, mode="auto",
                         invariant_buffers=1):
    ops, d = _prepare_operands(params, x, edge_index, batch, num_graphs,
                               target_idx, eps)
    n_pad, f_pad, h_pad, e_pad, g_pad = (d["n_pad"], d["f_pad"], d["h_pad"],
                                         d["e_pad"], d["g_pad"])
    L = d["num_layers"]

    def r8(v):
        return _round_up(v, 8)

    # Footprint if everything (incl. the full weight stack) sits in VMEM once.
    resident_bytes = (
        n_pad * n_pad * 2 + n_pad * f_pad * 2 + f_pad * h_pad * 2
        + r8(1) * h_pad * 4
        + L * (2 * h_pad * h_pad * 2 + 2 * r8(1) * h_pad * 4)
        + g_pad * n_pad * 2 + h_pad * e_pad * 2 + r8(1) * e_pad * 4
        + g_pad * e_pad * 4
        + 3 * n_pad * h_pad * 4)          # agg / z / h temporaries

    if mode == "auto":
        # Small weight stacks -> resident fori_loop kernel (no per-layer
        # pipeline overhead).  Large (e.g. 768x16 ~ 36 MiB) -> layer streaming.
        mode = "resident" if resident_bytes <= (24 << 20) else "streamed"

    if mode == "resident":
        vlimit = max(int(resident_bytes * 1.5) + (4 << 20), 32 << 20)
        out = pl.pallas_call(
            gin_resident_kernel,
            out_shape=jax.ShapeDtypeStruct((g_pad, e_pad), jnp.float32),
            compiler_params=pltpu.CompilerParams(vmem_limit_bytes=vlimit),
        )(*ops)
        return out[:d["g"], :d["e_dim"]]

    # ---- streamed: layer axis on the grid, per-layer weights double-buffered,
    # grid-invariant blocks single-buffered (constant index_map => a second
    # buffer would never be used).
    inv = invariant_buffers

    def const_spec(shape):
        imap = lambda l, _s=shape: (0,) * len(_s)
        if inv is None:
            return pl.BlockSpec(shape, imap)
        return pl.BlockSpec(shape, imap, pipeline_mode=pl.Buffered(inv))

    streamed_bytes = (
        (inv or 2) * (n_pad * n_pad * 2 + n_pad * f_pad * 2 + f_pad * h_pad * 2
                      + r8(1) * h_pad * 4 + g_pad * n_pad * 2
                      + h_pad * e_pad * 2 + r8(1) * e_pad * 4)
        + 2 * (2 * h_pad * h_pad * 2 + 2 * r8(1) * h_pad * 4)  # w1/b1/w2/b2 x2
        + 2 * g_pad * e_pad * 4                                 # out
        + n_pad * h_pad * 2                                     # h scratch bf16
        + 3 * n_pad * h_pad * 4)                                # agg/z temporaries
    vlimit = max(int(streamed_bytes * 1.25) + (4 << 20), 32 << 20)

    out = pl.pallas_call(
        gin_streamed_kernel,
        out_shape=jax.ShapeDtypeStruct((g_pad, e_pad), jnp.float32),
        grid_spec=pltpu.PrefetchScalarGridSpec(
            num_scalar_prefetch=0,
            grid=(L,),
            in_specs=[
                const_spec((n_pad, n_pad)),     # adj (resident, bf16)
                const_spec((n_pad, f_pad)),     # x
                const_spec((f_pad, h_pad)),     # proj_w
                const_spec((1, h_pad)),         # proj_b
                pl.BlockSpec((pl.Squeezed(), h_pad, h_pad), lambda l: (l, 0, 0)),  # w1[l]
                pl.BlockSpec((pl.Squeezed(), 1, h_pad), lambda l: (l, 0, 0)),      # b1[l]
                pl.BlockSpec((pl.Squeezed(), h_pad, h_pad), lambda l: (l, 0, 0)),  # w2[l]
                pl.BlockSpec((pl.Squeezed(), 1, h_pad), lambda l: (l, 0, 0)),      # b2[l]
                const_spec((g_pad, n_pad)),     # readout
                const_spec((h_pad, e_pad)),     # fc_w
                const_spec((1, e_pad)),         # fc_b
            ],
            out_specs=pl.BlockSpec((g_pad, e_pad), lambda l: (0, 0)),
            scratch_shapes=[pltpu.VMEM((n_pad, h_pad), jnp.bfloat16)],  # h carry
        ),
        compiler_params=pltpu.CompilerParams(
            dimension_semantics=("arbitrary",),   # layer axis is a sequential carry
            vmem_limit_bytes=vlimit),
    )(*ops)
    return out[:d["g"], :d["e_dim"]]


# --------------------------- pure-JAX reference -------------------------------
def reference_forward(params, x, edge_index, batch, num_graphs,
                      target_idx=None, eps=0.0):
    n = x.shape[0]
    adj = jnp.zeros((n, n), jnp.float32)
    adj = adj.at[edge_index[1], edge_index[0]].add(1.0)
    adj = adj.at[jnp.arange(n), jnp.arange(n)].add(1.0 + eps)
    adj_bf = adj.astype(jnp.bfloat16)

    h = jnp.dot(x.astype(jnp.bfloat16), params["proj_w"].astype(jnp.bfloat16),
                preferred_element_type=jnp.float32) + params["proj_b"]
    for lp in params["layers"]:
        agg = jnp.dot(adj_bf, h.astype(jnp.bfloat16),
                      preferred_element_type=jnp.float32)
        z = jnp.dot(agg.astype(jnp.bfloat16), lp["w1"].astype(jnp.bfloat16),
                    preferred_element_type=jnp.float32) + lp["b1"]
        z = jnp.maximum(z, 0.0)
        z = jnp.dot(z.astype(jnp.bfloat16), lp["w2"].astype(jnp.bfloat16),
                    preferred_element_type=jnp.float32) + lp["b2"]
        h = jnp.maximum(z, 0.0)
    if target_idx is not None:
        h = h[jnp.asarray(target_idx, jnp.int32).reshape(-1)]
    else:
        onehot = (batch[None, :] == jnp.arange(num_graphs)[:, None]).astype(jnp.float32)
        counts = jnp.maximum(onehot.sum(axis=1, keepdims=True), 1.0)
        h = (onehot / counts) @ h
    return jnp.dot(h, params["fc_w"]) + params["fc_b"]


# ------------------------------ parameters ------------------------------------
def init_params(key, num_node_features, hidden_dim, embedding_dim, num_layers):
    keys = jax.random.split(key, 4 + num_layers)
    scale = 0.1
    params = {
        "proj_w": scale * jax.random.normal(
            keys[0], (num_node_features, hidden_dim), jnp.float32),
        "proj_b": scale * jax.random.normal(keys[1], (hidden_dim,), jnp.float32),
        "fc_w": scale * jax.random.normal(
            keys[2], (hidden_dim, embedding_dim), jnp.float32),
        "fc_b": scale * jax.random.normal(keys[3], (embedding_dim,), jnp.float32),
        "layers": [],
    }
    for l in range(num_layers):
        k = jax.random.split(keys[4 + l], 4)
        params["layers"].append({
            "w1": scale * jax.random.normal(k[0], (hidden_dim, hidden_dim), jnp.float32),
            "b1": scale * jax.random.normal(k[1], (hidden_dim,), jnp.float32),
            "w2": scale * jax.random.normal(k[2], (hidden_dim, hidden_dim), jnp.float32),
            "b2": scale * jax.random.normal(k[3], (hidden_dim,), jnp.float32),
        })
    return params


# --------------------------------- main ----------------------------------------
if __name__ == "__main__":
    # Small, lane-aligned shapes consistent with the module
    # (defaults: features=5, hidden=768, embedding=512, layers=16 — scaled down).
    num_node_features = 5
    hidden_dim = 128
    embedding_dim = 128
    num_layers = 4

    key = jax.random.PRNGKey(0)
    k_param, k_x = jax.random.split(key)
    params = init_params(k_param, num_node_features, hidden_dim, embedding_dim,
                         num_layers)

    # Two graphs of 6 nodes each (N = 12), bidirectional ring edges per graph.
    nodes_per_graph = 6
    num_graphs = 2
    n = nodes_per_graph * num_graphs
    x = jax.random.normal(k_x, (n, num_node_features), jnp.float32)

    src, dst = [], []
    for g in range(num_graphs):
        off = g * nodes_per_graph
        for i in range(nodes_per_graph):
            j = (i + 1) % nodes_per_graph
            src += [off + i, off + j]
            dst += [off + j, off + i]
    edge_index = jnp.asarray(np.stack([src, dst]), dtype=jnp.int32)   # [2, E]
    batch = jnp.asarray(
        np.repeat(np.arange(num_graphs), nodes_per_graph), dtype=jnp.int32)

    ref = jax.block_until_ready(
        reference_forward(params, x, edge_index, batch, num_graphs))

    # Resident fori_loop path (the one "auto" selects at these shapes).
    out_resident = jax.block_until_ready(
        gin_baseline_forward(params, x, edge_index, batch, num_graphs,
                             mode="resident"))

    # Layer-streamed path (used for the real 768x16 config); single-buffered
    # invariant blocks, with a graceful fallback to default double-buffering
    # if this JAX build does not accept pipeline_mode=pl.Buffered(1).
    try:
        out_streamed = jax.block_until_ready(
            gin_baseline_forward(params, x, edge_index, batch, num_graphs,
                                 mode="streamed", invariant_buffers=1))
    except Exception:
        out_streamed = jax.block_until_ready(
            gin_baseline_forward(params, x, edge_index, batch, num_graphs,
                                 mode="streamed", invariant_buffers=None))

    for out in (out_resident, out_streamed):
        assert out.shape == (num_graphs, embedding_dim)
        assert bool(jnp.all(jnp.isfinite(out)))
        assert bool(jnp.allclose(out, ref, rtol=2e-2, atol=2e-2)), \
            float(jnp.max(jnp.abs(out - ref)))
    print("KERNEL_OK")
</pallas_src>

<mosaic_0001>
module attributes {stable_mosaic.version = 11 : i64} {
  func.func @gin_resident_kernel(%arg0: memref<128x128xbf16, #tpu.memory_space<vmem>>, %arg1: memref<128x128xbf16, #tpu.memory_space<vmem>>, %arg2: memref<128x128xbf16, #tpu.memory_space<vmem>>, %arg3: memref<1x128xf32, #tpu.memory_space<vmem>>, %arg4: memref<4x128x128xbf16, #tpu.memory_space<vmem>>, %arg5: memref<4x1x128xf32, #tpu.memory_space<vmem>>, %arg6: memref<4x128x128xbf16, #tpu.memory_space<vmem>>, %arg7: memref<4x1x128xf32, #tpu.memory_space<vmem>>, %arg8: memref<8x128xbf16, #tpu.memory_space<vmem>>, %arg9: memref<128x128xbf16, #tpu.memory_space<vmem>>, %arg10: memref<1x128xf32, #tpu.memory_space<vmem>>, %arg11: memref<8x128xf32, #tpu.memory_space<vmem>>) attributes {dimension_semantics = [], scalar_prefetch = 0 : i64, scratch_operands = 0 : i64, tpu.core_type = #tpu.core_type<tc>} {
    %c0 = arith.constant 0 : index
    %c0_0 = arith.constant 0 : index
    %0 = vector.load %arg1[%c0, %c0_0] : memref<128x128xbf16, #tpu.memory_space<vmem>>, vector<128x128xbf16>
    %c0_1 = arith.constant 0 : index
    %c0_2 = arith.constant 0 : index
    %1 = vector.load %arg2[%c0_1, %c0_2] : memref<128x128xbf16, #tpu.memory_space<vmem>>, vector<128x128xbf16>
    %cst = arith.constant dense<0.000000e+00> : vector<128x128xf32>
    %2 = tpu.matmul %0, %1, %cst {dimension_numbers = #tpu.dot_dimension_numbers<[1], [0], [0], [1], [0, 0, 1, 1], [], []>} : vector<128x128xbf16>, vector<128x128xbf16>, vector<128x128xf32> -> vector<128x128xf32>
    %c0_3 = arith.constant 0 : index
    %c0_4 = arith.constant 0 : index
    %3 = vector.load %arg3[%c0_3, %c0_4] : memref<1x128xf32, #tpu.memory_space<vmem>>, vector<1x128xf32>
    %4 = vector.broadcast %3 : vector<1x128xf32> to vector<128x128xf32>
    %5 = arith.addf %2, %4 : vector<128x128xf32>
    %6 = arith.truncf %5 : vector<128x128xf32> to vector<128x128xbf16>
    %c0_i32 = arith.constant 0 : i32
    %c0_5 = arith.constant 0 : index
    %c0_6 = arith.constant 0 : index
    %7 = vector.load %arg0[%c0_5, %c0_6] : memref<128x128xbf16, #tpu.memory_space<vmem>>, vector<128x128xbf16>
    %cst_7 = arith.constant dense<0.000000e+00> : vector<128x128xf32>
    %8 = tpu.matmul %7, %6, %cst_7 {dimension_numbers = #tpu.dot_dimension_numbers<[1], [0], [0], [1], [0, 0, 1, 1], [], []>} : vector<128x128xbf16>, vector<128x128xbf16>, vector<128x128xf32> -> vector<128x128xf32>
    %9 = arith.truncf %8 : vector<128x128xf32> to vector<128x128xbf16>
    %10 = arith.index_cast %c0_i32 : i32 to index
    %c0_8 = arith.constant 0 : index
    %c0_9 = arith.constant 0 : index
    %11 = vector.load %arg4[%10, %c0_8, %c0_9] : memref<4x128x128xbf16, #tpu.memory_space<vmem>>, vector<1x128x128xbf16>
    %12 = vector.shape_cast %11 : vector<1x128x128xbf16> to vector<128x128xbf16>
    %cst_10 = arith.constant dense<0.000000e+00> : vector<128x128xf32>
    %13 = tpu.matmul %9, %12, %cst_10 {dimension_numbers = #tpu.dot_dimension_numbers<[1], [0], [0], [1], [0, 0, 1, 1], [], []>} : vector<128x128xbf16>, vector<128x128xbf16>, vector<128x128xf32> -> vector<128x128xf32>
    %14 = arith.index_cast %c0_i32 : i32 to index
    %c0_11 = arith.constant 0 : index
    %c0_12 = arith.constant 0 : index
    %15 = vector.load %arg5[%14, %c0_11, %c0_12] : memref<4x1x128xf32, #tpu.memory_space<vmem>>, vector<1x1x128xf32>
    %16 = vector.shape_cast %15 : vector<1x1x128xf32> to vector<1x128xf32>
    %17 = vector.broadcast %16 : vector<1x128xf32> to vector<128x128xf32>
    %18 = arith.addf %13, %17 : vector<128x128xf32>
    %cst_13 = arith.constant 0.000000e+00 : f32
    %19 = vector.broadcast %cst_13 : f32 to vector<128x128xf32>
    %20 = arith.maximumf %18, %19 : vector<128x128xf32>
    %21 = arith.truncf %20 : vector<128x128xf32> to vector<128x128xbf16>
    %22 = arith.index_cast %c0_i32 : i32 to index
    %c0_14 = arith.constant 0 : index
    %c0_15 = arith.constant 0 : index
    %23 = vector.load %arg6[%22, %c0_14, %c0_15] : memref<4x128x128xbf16, #tpu.memory_space<vmem>>, vector<1x128x128xbf16>
    %24 = vector.shape_cast %23 : vector<1x128x128xbf16> to vector<128x128xbf16>
    %cst_16 = arith.constant dense<0.000000e+00> : vector<128x128xf32>
    %25 = tpu.matmul %21, %24, %cst_16 {dimension_numbers = #tpu.dot_dimension_numbers<[1], [0], [0], [1], [0, 0, 1, 1], [], []>} : vector<128x128xbf16>, vector<128x128xbf16>, vector<128x128xf32> -> vector<128x128xf32>
    %26 = arith.index_cast %c0_i32 : i32 to index
    %c0_17 = arith.constant 0 : index
    %c0_18 = arith.constant 0 : index
    %27 = vector.load %arg7[%26, %c0_17, %c0_18] : memref<4x1x128xf32, #tpu.memory_space<vmem>>, vector<1x1x128xf32>
    %28 = vector.shape_cast %27 : vector<1x1x128xf32> to vector<1x128xf32>
    %29 = vector.broadcast %28 : vector<1x128xf32> to vector<128x128xf32>
    %30 = arith.addf %25, %29 : vector<128x128xf32>
    %cst_19 = arith.constant 0.000000e+00 : f32
    %31 = vector.broadcast %cst_19 : f32 to vector<128x128xf32>
    %32 = arith.maximumf %30, %31 : vector<128x128xf32>
    %33 = arith.truncf %32 : vector<128x128xf32> to vector<128x128xbf16>
    %c1_i32 = arith.constant 1 : i32
    %c0_20 = arith.constant 0 : index
    %c0_21 = arith.constant 0 : index
    %34 = vector.load %arg0[%c0_20, %c0_21] : memref<128x128xbf16, #tpu.memory_space<vmem>>, vector<128x128xbf16>
    %cst_22 = arith.constant dense<0.000000e+00> : vector<128x128xf32>
    %35 = tpu.matmul %34, %33, %cst_22 {dimension_numbers = #tpu.dot_dimension_numbers<[1], [0], [0], [1], [0, 0, 1, 1], [], []>} : vector<128x128xbf16>, vector<128x128xbf16>, vector<128x128xf32> -> vector<128x128xf32>
    %36 = arith.truncf %35 : vector<128x128xf32> to vector<128x128xbf16>
    %37 = arith.index_cast %c1_i32 : i32 to index
    %c0_23 = arith.constant 0 : index
    %c0_24 = arith.constant 0 : index
    %38 = vector.load %arg4[%37, %c0_23, %c0_24] : memref<4x128x128xbf16, #tpu.memory_space<vmem>>, vector<1x128x128xbf16>
    %39 = vector.shape_cast %38 : vector<1x128x128xbf16> to vector<128x128xbf16>
    %cst_25 = arith.constant dense<0.000000e+00> : vector<128x128xf32>
    %40 = tpu.matmul %36, %39, %cst_25 {dimension_numbers = #tpu.dot_dimension_numbers<[1], [0], [0], [1], [0, 0, 1, 1], [], []>} : vector<128x128xbf16>, vector<128x128xbf16>, vector<128x128xf32> -> vector<128x128xf32>
    %41 = arith.index_cast %c1_i32 : i32 to index
    %c0_26 = arith.constant 0 : index
    %c0_27 = arith.constant 0 : index
    %42 = vector.load %arg5[%41, %c0_26, %c0_27] : memref<4x1x128xf32, #tpu.memory_space<vmem>>, vector<1x1x128xf32>
    %43 = vector.shape_cast %42 : vector<1x1x128xf32> to vector<1x128xf32>
    %44 = vector.broadcast %43 : vector<1x128xf32> to vector<128x128xf32>
    %45 = arith.addf %40, %44 : vector<128x128xf32>
    %cst_28 = arith.constant 0.000000e+00 : f32
    %46 = vector.broadcast %cst_28 : f32 to vector<128x128xf32>
    %47 = arith.maximumf %45, %46 : vector<128x128xf32>
    %48 = arith.truncf %47 : vector<128x128xf32> to vector<128x128xbf16>
    %49 = arith.index_cast %c1_i32 : i32 to index
    %c0_29 = arith.constant 0 : index
    %c0_30 = arith.constant 0 : index
    %50 = vector.load %arg6[%49, %c0_29, %c0_30] : memref<4x128x128xbf16, #tpu.memory_space<vmem>>, vector<1x128x128xbf16>
    %51 = vector.shape_cast %50 : vector<1x128x128xbf16> to vector<128x128xbf16>
    %cst_31 = arith.constant dense<0.000000e+00> : vector<128x128xf32>
    %52 = tpu.matmul %48, %51, %cst_31 {dimension_numbers = #tpu.dot_dimension_numbers<[1], [0], [0], [1], [0, 0, 1, 1], [], []>} : vector<128x128xbf16>, vector<128x128xbf16>, vector<128x128xf32> -> vector<128x128xf32>
    %53 = arith.index_cast %c1_i32 : i32 to index
    %c0_32 = arith.constant 0 : index
    %c0_33 = arith.constant 0 : index
    %54 = vector.load %arg7[%53, %c0_32, %c0_33] : memref<4x1x128xf32, #tpu.memory_space<vmem>>, vector<1x1x128xf32>
    %55 = vector.shape_cast %54 : vector<1x1x128xf32> to vector<1x128xf32>
    %56 = vector.broadcast %55 : vector<1x128xf32> to vector<128x128xf32>
    %57 = arith.addf %52, %56 : vector<128x128xf32>
    %cst_34 = arith.constant 0.000000e+00 : f32
    %58 = vector.broadcast %cst_34 : f32 to vector<128x128xf32>
    %59 = arith.maximumf %57, %58 : vector<128x128xf32>
    %60 = arith.truncf %59 : vector<128x128xf32> to vector<128x128xbf16>
    %c2_i32 = arith.constant 2 : i32
    %c0_35 = arith.constant 0 : index
    %c0_36 = arith.constant 0 : index
    %61 = vector.load %arg0[%c0_35, %c0_36] : memref<128x128xbf16, #tpu.memory_space<vmem>>, vector<128x128xbf16>
    %cst_37 = arith.constant dense<0.000000e+00> : vector<128x128xf32>
    %62 = tpu.matmul %61, %60, %cst_37 {dimension_numbers = #tpu.dot_dimension_numbers<[1], [0], [0], [1], [0, 0, 1, 1], [], []>} : vector<128x128xbf16>, vector<128x128xbf16>, vector<128x128xf32> -> vector<128x128xf32>
    %63 = arith.truncf %62 : vector<128x128xf32> to vector<128x128xbf16>
    %64 = arith.index_cast %c2_i32 : i32 to index
    %c0_38 = arith.constant 0 : index
    %c0_39 = arith.constant 0 : index
    %65 = vector.load %arg4[%64, %c0_38, %c0_39] : memref<4x128x128xbf16, #tpu.memory_space<vmem>>, vector<1x128x128xbf16>
    %66 = vector.shape_cast %65 : vector<1x128x128xbf16> to vector<128x128xbf16>
    %cst_40 = arith.constant dense<0.000000e+00> : vector<128x128xf32>
    %67 = tpu.matmul %63, %66, %cst_40 {dimension_numbers = #tpu.dot_dimension_numbers<[1], [0], [0], [1], [0, 0, 1, 1], [], []>} : vector<128x128xbf16>, vector<128x128xbf16>, vector<128x128xf32> -> vector<128x128xf32>
    %68 = arith.index_cast %c2_i32 : i32 to index
    %c0_41 = arith.constant 0 : index
    %c0_42 = arith.constant 0 : index
    %69 = vector.load %arg5[%68, %c0_41, %c0_42] : memref<4x1x128xf32, #tpu.memory_space<vmem>>, vector<1x1x128xf32>
    %70 = vector.shape_cast %69 : vector<1x1x128xf32> to vector<1x128xf32>
    %71 = vector.broadcast %70 : vector<1x128xf32> to vector<128x128xf32>
    %72 = arith.addf %67, %71 : vector<128x128xf32>
    %cst_43 = arith.constant 0.000000e+00 : f32
    %73 = vector.broadcast %cst_43 : f32 to vector<128x128xf32>
    %74 = arith.maximumf %72, %73 : vector<128x128xf32>
    %75 = arith.truncf %74 : vector<128x128xf32> to vector<128x128xbf16>
    %76 = arith.index_cast %c2_i32 : i32 to index
    %c0_44 = arith.constant 0 : index
    %c0_45 = arith.constant 0 : index
    %77 = vector.load %arg6[%76, %c0_44, %c0_45] : memref<4x128x128xbf16, #tpu.memory_space<vmem>>, vector<1x128x128xbf16>
    %78 = vector.shape_cast %77 : vector<1x128x128xbf16> to vector<128x128xbf16>
    %cst_46 = arith.constant dense<0.000000e+00> : vector<128x128xf32>
    %79 = tpu.matmul %75, %78, %cst_46 {dimension_numbers = #tpu.dot_dimension_numbers<[1], [0], [0], [1], [0, 0, 1, 1], [], []>} : vector<128x128xbf16>, vector<128x128xbf16>, vector<128x128xf32> -> vector<128x128xf32>
    %80 = arith.index_cast %c2_i32 : i32 to index
    %c0_47 = arith.constant 0 : index
    %c0_48 = arith.constant 0 : index
    %81 = vector.load %arg7[%80, %c0_47, %c0_48] : memref<4x1x128xf32, #tpu.memory_space<vmem>>, vector<1x1x128xf32>
    %82 = vector.shape_cast %81 : vector<1x1x128xf32> to vector<1x128xf32>
    %83 = vector.broadcast %82 : vector<1x128xf32> to vector<128x128xf32>
    %84 = arith.addf %79, %83 : vector<128x128xf32>
    %cst_49 = arith.constant 0.000000e+00 : f32
    %85 = vector.broadcast %cst_49 : f32 to vector<128x128xf32>
    %86 = arith.maximumf %84, %85 : vector<128x128xf32>
    %87 = arith.truncf %86 : vector<128x128xf32> to vector<128x128xbf16>
    %c3_i32 = arith.constant 3 : i32
    %c0_50 = arith.constant 0 : index
    %c0_51 = arith.constant 0 : index
    %88 = vector.load %arg0[%c0_50, %c0_51] : memref<128x128xbf16, #tpu.memory_space<vmem>>, vector<128x128xbf16>
    %cst_52 = arith.constant dense<0.000000e+00> : vector<128x128xf32>
    %89 = tpu.matmul %88, %87, %cst_52 {dimension_numbers = #tpu.dot_dimension_numbers<[1], [0], [0], [1], [0, 0, 1, 1], [], []>} : vector<128x128xbf16>, vector<128x128xbf16>, vector<128x128xf32> -> vector<128x128xf32>
    %90 = arith.truncf %89 : vector<128x128xf32> to vector<128x128xbf16>
    %91 = arith.index_cast %c3_i32 : i32 to index
    %c0_53 = arith.constant 0 : index
    %c0_54 = arith.constant 0 : index
    %92 = vector.load %arg4[%91, %c0_53, %c0_54] : memref<4x128x128xbf16, #tpu.memory_space<vmem>>, vector<1x128x128xbf16>
    %93 = vector.shape_cast %92 : vector<1x128x128xbf16> to vector<128x128xbf16>
    %cst_55 = arith.constant dense<0.000000e+00> : vector<128x128xf32>
    %94 = tpu.matmul %90, %93, %cst_55 {dimension_numbers = #tpu.dot_dimension_numbers<[1], [0], [0], [1], [0, 0, 1, 1], [], []>} : vector<128x128xbf16>, vector<128x128xbf16>, vector<128x128xf32> -> vector<128x128xf32>
    %95 = arith.index_cast %c3_i32 : i32 to index
    %c0_56 = arith.constant 0 : index
    %c0_57 = arith.constant 0 : index
    %96 = vector.load %arg5[%95, %c0_56, %c0_57] : memref<4x1x128xf32, #tpu.memory_space<vmem>>, vector<1x1x128xf32>
    %97 = vector.shape_cast %96 : vector<1x1x128xf32> to vector<1x128xf32>
    %98 = vector.broadcast %97 : vector<1x128xf32> to vector<128x128xf32>
    %99 = arith.addf %94, %98 : vector<128x128xf32>
    %cst_58 = arith.constant 0.000000e+00 : f32
    %100 = vector.broadcast %cst_58 : f32 to vector<128x128xf32>
    %101 = arith.maximumf %99, %100 : vector<128x128xf32>
    %102 = arith.truncf %101 : vector<128x128xf32> to vector<128x128xbf16>
    %103 = arith.index_cast %c3_i32 : i32 to index
    %c0_59 = arith.constant 0 : index
    %c0_60 = arith.constant 0 : index
    %104 = vector.load %arg6[%103, %c0_59, %c0_60] : memref<4x128x128xbf16, #tpu.memory_space<vmem>>, vector<1x128x128xbf16>
    %105 = vector.shape_cast %104 : vector<1x128x128xbf16> to vector<128x128xbf16>
    %cst_61 = arith.constant dense<0.000000e+00> : vector<128x128xf32>
    %106 = tpu.matmul %102, %105, %cst_61 {dimension_numbers = #tpu.dot_dimension_numbers<[1], [0], [0], [1], [0, 0, 1, 1], [], []>} : vector<128x128xbf16>, vector<128x128xbf16>, vector<128x128xf32> -> vector<128x128xf32>
    %107 = arith.index_cast %c3_i32 : i32 to index
    %c0_62 = arith.constant 0 : index
    %c0_63 = arith.constant 0 : index
    %108 = vector.load %arg7[%107, %c0_62, %c0_63] : memref<4x1x128xf32, #tpu.memory_space<vmem>>, vector<1x1x128xf32>
    %109 = vector.shape_cast %108 : vector<1x1x128xf32> to vector<1x128xf32>
    %110 = vector.broadcast %109 : vector<1x128xf32> to vector<128x128xf32>
    %111 = arith.addf %106, %110 : vector<128x128xf32>
    %cst_64 = arith.constant 0.000000e+00 : f32
    %112 = vector.broadcast %cst_64 : f32 to vector<128x128xf32>
    %113 = arith.maximumf %111, %112 : vector<128x128xf32>
    %114 = arith.truncf %113 : vector<128x128xf32> to vector<128x128xbf16>
    %c4_i32 = arith.constant 4 : i32
    %c0_65 = arith.constant 0 : index
    %c0_66 = arith.constant 0 : index
    %115 = vector.load %arg8[%c0_65, %c0_66] : memref<8x128xbf16, #tpu.memory_space<vmem>>, vector<8x128xbf16>
    %cst_67 = arith.constant dense<0.000000e+00> : vector<8x128xf32>
    %116 = tpu.matmul %115, %114, %cst_67 {dimension_numbers = #tpu.dot_dimension_numbers<[1], [0], [0], [1], [0, 0, 1, 1], [], []>} : vector<8x128xbf16>, vector<128x128xbf16>, vector<8x128xf32> -> vector<8x128xf32>
    %117 = arith.truncf %116 : vector<8x128xf32> to vector<8x128xbf16>
    %c0_68 = arith.constant 0 : index
    %c0_69 = arith.constant 0 : index
    %118 = vector.load %arg9[%c0_68, %c0_69] : memref<128x128xbf16, #tpu.memory_space<vmem>>, vector<128x128xbf16>
    %cst_70 = arith.constant dense<0.000000e+00> : vector<8x128xf32>
    %119 = tpu.matmul %117, %118, %cst_70 {dimension_numbers = #tpu.dot_dimension_numbers<[1], [0], [0], [1], [0, 0, 1, 1], [], []>} : vector<8x128xbf16>, vector<128x128xbf16>, vector<8x128xf32> -> vector<8x128xf32>
    %c0_71 = arith.constant 0 : index
    %c0_72 = arith.constant 0 : index
    %120 = vector.load %arg10[%c0_71, %c0_72] : memref<1x128xf32, #tpu.memory_space<vmem>>, vector<1x128xf32>
    %121 = vector.broadcast %120 : vector<1x128xf32> to vector<8x128xf32>
    %122 = arith.addf %119, %121 : vector<8x128xf32>
    %c0_73 = arith.constant 0 : index
    %c0_74 = arith.constant 0 : index
    %123 = vector.load %arg11[%c0_73, %c0_74] : memref<8x128xf32, #tpu.memory_space<vmem>>, vector<8x128xf32>
    tpu.vector_store %arg11[%c0_73, %c0_74], %122 {strides = array<i32>} : memref<8x128xf32, #tpu.memory_space<vmem>>, vector<8x128xf32>,
    return
  }
}

</mosaic_0001>

<llo_original>
// kernel: tpu_custom_call.1
$region0: #{tpu_custom_call.1}
  #allocation0 [shape = 'u32[]', space=smem, size = 0x4, offset = 0x4, fixed_abs, tag = 'smem constant byte address 0x4 - core index']
  #allocation1 [shape = 'u32[72,128]{1,0:T(1,128)}', space=vmem, size = 0x9000, scoped, tag = 'internal scratch']
  %s0 = inlined_call_operand.hbm [shape: bf16[128,128], index: 0, kind: input, shape index: {}]
  %s1 = inlined_call_operand.hbm [shape: bf16[128,128], index: 1, kind: input, shape index: {}]
  %s2 = inlined_call_operand.hbm [shape: bf16[128,128], index: 2, kind: input, shape index: {}]
  %s3 = inlined_call_operand.hbm [shape: f32[1,128], index: 3, kind: input, shape index: {}]
  %s4 = inlined_call_operand.hbm [shape: bf16[4,128,128], index: 4, kind: input, shape index: {}]
  %s5 = inlined_call_operand.vmem [shape: f32[4,1,128], index: 5, kind: input, shape index: {}]
  %s6 = inlined_call_operand.hbm [shape: bf16[4,128,128], index: 6, kind: input, shape index: {}]
  %s7 = inlined_call_operand.hbm [shape: f32[4,1,128], index: 7, kind: input, shape index: {}]
  %s8 = inlined_call_operand.hbm [shape: bf16[8,128], index: 8, kind: input, shape index: {}]
  %s9 = inlined_call_operand.hbm [shape: bf16[128,128], index: 9, kind: input, shape index: {}]
  %s10 = inlined_call_operand.vmem [shape: f32[1,128], index: 10, kind: input, shape index: {}]
  %s11 = inlined_call_operand.hbm [shape: f32[8,128], index: 11, kind: output, shape index: {}]
  %s12 = sld [smem:[#allocation0]]
  $region90: #{tpu_custom_call.1} parent=0
    _
  %s14 = ssub.s32 1, %s12
  %s15 = scalar_select 0, %s14, %s12
  $region1: #{tpu_custom_call.1} parent=0
    #allocation2 [shape = 'u8[32768]{0}', space=vmem, size = 0x8000, scoped, tag = 'input window, operand 0, single buffered']
    #allocation3 [shape = 's32[1]{0}', space=sflag, size = 0x4, scoped, tag = 'scoped memory for tpu_custom_call.1']
    #allocation4 [shape = 's32[1]{0}', space=sflag, size = 0x4, scoped, tag = 'scoped memory for tpu_custom_call.1']
    #allocation5 [shape = 'u8[32768]{0}', space=vmem, size = 0x8000, scoped, tag = 'input window, operand 1, single buffered']
    #allocation6 [shape = 's32[1]{0}', space=sflag, size = 0x4, scoped, tag = 'scoped memory for tpu_custom_call.1']
    #allocation7 [shape = 'u8[32768]{0}', space=vmem, size = 0x8000, scoped, tag = 'input window, operand 2, single buffered']
    #allocation8 [shape = 'u8[512]{0}', space=vmem, size = 0x400, scoped, tag = 'input window, operand 3, single buffered']
    #allocation9 [shape = 's32[1]{0}', space=sflag, size = 0x4, scoped, tag = 'scoped memory for tpu_custom_call.1']
    #allocation10 [shape = 'u8[131072]{0}', space=vmem, size = 0x20000, scoped, tag = 'input window, operand 4, single buffered']
    #allocation11 [shape = 'u8[131072]{0}', space=vmem, size = 0x20000, scoped, tag = 'input window, operand 6, single buffered']
    #allocation12 [shape = 's32[1]{0}', space=sflag, size = 0x4, scoped, tag = 'scoped memory for tpu_custom_call.1']
    #allocation13 [shape = 'u8[2048]{0}', space=vmem, size = 0x800, scoped, tag = 'input window, operand 7, single buffered']
    #allocation14 [shape = 'u8[2048]{0}', space=vmem, size = 0x800, scoped, tag = 'input window, operand 8, single buffered']
    #allocation15 [shape = 's32[1]{0}', space=sflag, size = 0x4, scoped, tag = 'scoped memory for tpu_custom_call.1']
    #allocation16 [shape = 'u8[32768]{0}', space=vmem, size = 0x8000, scoped, tag = 'input window, operand 9, single buffered']
    #allocation17 [shape = 'u8[4096]{0}', space=vmem, size = 0x1000, scoped, tag = 'output window, operand 0, single buffered']
    %16 = vsyncpa [#allocation3], 0
    %17 = vsyncpa [#allocation6], 0
    %18 = vsyncpa [#allocation9], 0
    %19 = vsyncpa [#allocation12], 0
    %20 = vsyncpa [#allocation15], 0
    %21 = vsyncpa [#allocation4], 0
    // Predicated region
    $region2: #{tpu_custom_call.1} parent=1 // pred_check
      _
    $region3: #{tpu_custom_call.1} parent=1 // pred_check_branch
      %23 = sbr.rel (0) target = $region5
    $region4: #{tpu_custom_call.1} parent=1 // pred_region
      %25 = vsyncadd [#allocation3], 0
      %s26 = sshll.u32 %s0, 4
      %s27 = int_to_ptr.hbm [resolvable:$true] %s26
      %s28 = sshll.u32 [#allocation2], 4
      %s29 = int_to_ptr.vmem [resolvable:$true] %s28
      %34 = dma.hbm_to_vmem [thread:$0]  %s27, 1024, %s29, [#allocation3], 64, 64, 4
    $region5: #{tpu_custom_call.1} parent=1 // pred_fallthru
      _
    // Predicated region
    $region6: #{tpu_custom_call.1} parent=1 // pred_check
      _
    $region7: #{tpu_custom_call.1} parent=1 // pred_check_branch
      %36 = sbr.rel (0) target = $region9
    $region8: #{tpu_custom_call.1} parent=1 // pred_region
      %38 = vsyncadd [#allocation6], 0
      %s39 = sshll.u32 %s1, 4
      %s40 = int_to_ptr.hbm [resolvable:$true] %s39
      %s41 = sshll.u32 [#allocation5], 4
      %s42 = int_to_ptr.vmem [resolvable:$true] %s41
      %47 = dma.hbm_to_vmem [thread:$0]  %s40, 1024, %s42, [#allocation6], 64, 64, 4
    $region9: #{tpu_custom_call.1} parent=1 // pred_fallthru
      _
    // Predicated region
    $region10: #{tpu_custom_call.1} parent=1 // pred_check
      _
    $region11: #{tpu_custom_call.1} parent=1 // pred_check_branch
      %49 = sbr.rel (0) target = $region13
    $region12: #{tpu_custom_call.1} parent=1 // pred_region
      %51 = vsyncadd [#allocation6], 0
      %s52 = sshll.u32 %s2, 4
      %s53 = int_to_ptr.hbm [resolvable:$true] %s52
      %s54 = sshll.u32 [#allocation7], 4
      %s55 = int_to_ptr.vmem [resolvable:$true] %s54
      %60 = dma.hbm_to_vmem [thread:$0]  %s53, 1024, %s55, [#allocation6], 64, 64, 4
    $region13: #{tpu_custom_call.1} parent=1 // pred_fallthru
      _
    // Predicated region
    $region14: #{tpu_custom_call.1} parent=1 // pred_check
      _
    $region15: #{tpu_custom_call.1} parent=1 // pred_check_branch
      %62 = sbr.rel (0) target = $region17
    $region16: #{tpu_custom_call.1} parent=1 // pred_region
      %64 = vsyncadd [#allocation9], 0
      %s66 = sshll.u32 %s3, 4
      %s67 = int_to_ptr.hbm [resolvable:$true] %s66
      %s68 = sshll.u32 [#allocation8], 4
      %s69 = int_to_ptr.vmem [resolvable:$true] %s68
      %71 = dma.hbm_to_vmem [thread:$0]  %s67, 16, %s69, [#allocation9]
    $region17: #{tpu_custom_call.1} parent=1 // pred_fallthru
      _
    // Predicated region
    $region18: #{tpu_custom_call.1} parent=1 // pred_check
      _
    $region19: #{tpu_custom_call.1} parent=1 // pred_check_branch
      %73 = sbr.rel (0) target = $region21
    $region20: #{tpu_custom_call.1} parent=1 // pred_region
      %75 = vsyncadd [#allocation9], 0
      %s76 = sshll.u32 %s4, 4
      %s77 = int_to_ptr.hbm [resolvable:$true] %s76
      %s78 = sshll.u32 [#allocation10], 4
      %s79 = int_to_ptr.vmem [resolvable:$true] %s78
      %84 = dma.hbm_to_vmem [thread:$0]  %s77, 4096, %s79, [#allocation9], 64, 64, 4
    $region21: #{tpu_custom_call.1} parent=1 // pred_fallthru
      _
    // Predicated region
    $region22: #{tpu_custom_call.1} parent=1 // pred_check
      _
    $region23: #{tpu_custom_call.1} parent=1 // pred_check_branch
      %86 = sbr.rel (0) target = $region25
    $region24: #{tpu_custom_call.1} parent=1 // pred_region
      _
    $region25: #{tpu_custom_call.1} parent=1 // pred_fallthru
      _
    // Predicated region
    $region26: #{tpu_custom_call.1} parent=1 // pred_check
      _
    $region27: #{tpu_custom_call.1} parent=1 // pred_check_branch
      %88 = sbr.rel (0) target = $region29
    $region28: #{tpu_custom_call.1} parent=1 // pred_region
      %90 = vsyncadd [#allocation12], 0
      %s91 = sshll.u32 %s6, 4
      %s92 = int_to_ptr.hbm [resolvable:$true] %s91
      %s93 = sshll.u32 [#allocation11], 4
      %s94 = int_to_ptr.vmem [resolvable:$true] %s93
      %99 = dma.hbm_to_vmem [thread:$0]  %s92, 4096, %s94, [#allocation12], 64, 64, 4
    $region29: #{tpu_custom_call.1} parent=1 // pred_fallthru
      _
    // Predicated region
    $region30: #{tpu_custom_call.1} parent=1 // pred_check
      _
    $region31: #{tpu_custom_call.1} parent=1 // pred_check_branch
      %101 = sbr.rel (0) target = $region33
    $region32: #{tpu_custom_call.1} parent=1 // pred_region
      %103 = vsyncadd [#allocation12], 0
      %s104 = sshll.u32 %s7, 4
      %s105 = int_to_ptr.hbm [resolvable:$true] %s104
      %s106 = sshll.u32 [#allocation13], 4
      %s107 = int_to_ptr.vmem [resolvable:$true] %s106
      %112 = dma.hbm_to_vmem [thread:$0]  %s105, 64, %s107, [#allocation12], 16, 16, 1
    $region33: #{tpu_custom_call.1} parent=1 // pred_fallthru
      _
    // Predicated region
    $region34: #{tpu_custom_call.1} parent=1 // pred_check
      _
    $region35: #{tpu_custom_call.1} parent=1 // pred_check_branch
      %114 = sbr.rel (0) target = $region37
    $region36: #{tpu_custom_call.1} parent=1 // pred_region
      %116 = vsyncadd [#allocation15], 0
      %s118 = sshll.u32 %s8, 4
      %s119 = int_to_ptr.hbm [resolvable:$true] %s118
      %s120 = sshll.u32 [#allocation14], 4
      %s121 = int_to_ptr.vmem [resolvable:$true] %s120
      %123 = dma.hbm_to_vmem [thread:$0]  %s119, 64, %s121, [#allocation15]
    $region37: #{tpu_custom_call.1} parent=1 // pred_fallthru
      _
    // Predicated region
    $region38: #{tpu_custom_call.1} parent=1 // pred_check
      _
    $region39: #{tpu_custom_call.1} parent=1 // pred_check_branch
      %125 = sbr.rel (0) target = $region41
    $region40: #{tpu_custom_call.1} parent=1 // pred_region
      %127 = vsyncadd [#allocation15], 0
      %s128 = sshll.u32 %s9, 4
      %s129 = int_to_ptr.hbm [resolvable:$true] %s128
      %s130 = sshll.u32 [#allocation16], 4
      %s131 = int_to_ptr.vmem [resolvable:$true] %s130
      %136 = dma.hbm_to_vmem [thread:$0]  %s129, 1024, %s131, [#allocation15], 64, 64, 4
    $region41: #{tpu_custom_call.1} parent=1 // pred_fallthru
      _
    // Predicated region
    $region42: #{tpu_custom_call.1} parent=1 // pred_check
      _
    $region43: #{tpu_custom_call.1} parent=1 // pred_check_branch
      %138 = sbr.rel (0) target = $region45
    $region44: #{tpu_custom_call.1} parent=1 // pred_region
      _
    $region45: #{tpu_custom_call.1} parent=1 // pred_fallthru
      _
    // Predicated region
    $region46: #{tpu_custom_call.1} parent=1 // pred_check
      _
    $region47: #{tpu_custom_call.1} parent=1 // pred_check_branch
      %140 = sbr.rel (0) target = $region49
    $region48: #{tpu_custom_call.1} parent=1 // pred_region
      %142 = dma.done [#allocation3], 1024
    $region49: #{tpu_custom_call.1} parent=1 // pred_fallthru
      _
    // Predicated region
    $region50: #{tpu_custom_call.1} parent=1 // pred_check
      _
    $region51: #{tpu_custom_call.1} parent=1 // pred_check_branch
      %144 = sbr.rel (0) target = $region53
    $region52: #{tpu_custom_call.1} parent=1 // pred_region
      %146 = dma.done [#allocation6], 1024
    $region53: #{tpu_custom_call.1} parent=1 // pred_fallthru
      _
    // Predicated region
    $region54: #{tpu_custom_call.1} parent=1 // pred_check
      _
    $region55: #{tpu_custom_call.1} parent=1 // pred_check_branch
      %148 = sbr.rel (0) target = $region57
    $region56: #{tpu_custom_call.1} parent=1 // pred_region
      %150 = dma.done [#allocation6], 1024
    $region57: #{tpu_custom_call.1} parent=1 // pred_fallthru
      _
    // Predicated region
    $region58: #{tpu_custom_call.1} parent=1 // pred_check
      _
    $region59: #{tpu_custom_call.1} parent=1 // pred_check_branch
      %152 = sbr.rel (0) target = $region61
    $region60: #{tpu_custom_call.1} parent=1 // pred_region
      %154 = dma.done [#allocation9], 16
    $region61: #{tpu_custom_call.1} parent=1 // pred_fallthru
      _
    // Predicated region
    $region62: #{tpu_custom_call.1} parent=1 // pred_check
      _
    $region63: #{tpu_custom_call.1} parent=1 // pred_check_branch
      %156 = sbr.rel (0) target = $region65
    $region64: #{tpu_custom_call.1} parent=1 // pred_region
      %158 = dma.done [#allocation9], 4096
    $region65: #{tpu_custom_call.1} parent=1 // pred_fallthru
      _
    // Predicated region
    $region66: #{tpu_custom_call.1} parent=1 // pred_check
      _
    $region67: #{tpu_custom_call.1} parent=1 // pred_check_branch
      %160 = sbr.rel (0) target = $region69
    $region68: #{tpu_custom_call.1} parent=1 // pred_region
      %162 = dma.done [#allocation12], 4096
    $region69: #{tpu_custom_call.1} parent=1 // pred_fallthru
      _
    // Predicated region
    $region70: #{tpu_custom_call.1} parent=1 // pred_check
      _
    $region71: #{tpu_custom_call.1} parent=1 // pred_check_branch
      %164 = sbr.rel (0) target = $region73
    $region72: #{tpu_custom_call.1} parent=1 // pred_region
      %166 = dma.done [#allocation12], 64
    $region73: #{tpu_custom_call.1} parent=1 // pred_fallthru
      _
    // Predicated region
    $region74: #{tpu_custom_call.1} parent=1 // pred_check
      _
    $region75: #{tpu_custom_call.1} parent=1 // pred_check_branch
      %168 = sbr.rel (0) target = $region77
    $region76: #{tpu_custom_call.1} parent=1 // pred_region
      %170 = dma.done [#allocation15], 64
    $region77: #{tpu_custom_call.1} parent=1 // pred_fallthru
      _
    // Predicated region
    $region78: #{tpu_custom_call.1} parent=1 // pred_check
      _
    $region79: #{tpu_custom_call.1} parent=1 // pred_check_branch
      %172 = sbr.rel (0) target = $region81
    $region80: #{tpu_custom_call.1} parent=1 // pred_region
      %174 = dma.done [#allocation15], 1024
    $region81: #{tpu_custom_call.1} parent=1 // pred_fallthru
      _
    %v175 = vld [vmem:[#allocation5] sm:$0xf]
    %v176 = vld [vmem:[#allocation5 + $0x4] sm:$0xf]
    %v177 = vld [vmem:[#allocation5 + $0x8] sm:$0xf]
    %v178 = vld [vmem:[#allocation5 + $0xc] sm:$0xf]
    %v179 = vld [vmem:[#allocation5 + $0x10] sm:$0xf]
    %v180 = vld [vmem:[#allocation5 + $0x14] sm:$0xf]
    %v181 = vld [vmem:[#allocation5 + $0x18] sm:$0xf]
    %v182 = vld [vmem:[#allocation5 + $0x1c] sm:$0xf]
    %v183 = vld [vmem:[#allocation5 + $0x20] sm:$0xf]
    %v184 = vld [vmem:[#allocation5 + $0x24] sm:$0xf]
    %v185 = vld [vmem:[#allocation5 + $0x28] sm:$0xf]
    %v186 = vld [vmem:[#allocation5 + $0x2c] sm:$0xf]
    %v187 = vld [vmem:[#allocation5 + $0x30] sm:$0xf]
    %v188 = vld [vmem:[#allocation5 + $0x34] sm:$0xf]
    %v189 = vld [vmem:[#allocation5 + $0x38] sm:$0xf]
    %v190 = vld [vmem:[#allocation5 + $0x3c] sm:$0xf]
    %v191 = vld [vmem:[#allocation7] sm:$0xf]
    %v192 = vld [vmem:[#allocation7 + $0x4] sm:$0xf]
    %v193 = vld [vmem:[#allocation7 + $0x8] sm:$0xf]
    %v194 = vld [vmem:[#allocation7 + $0xc] sm:$0xf]
    %v195 = vld [vmem:[#allocation7 + $0x10] sm:$0xf]
    %v196 = vld [vmem:[#allocation7 + $0x14] sm:$0xf]
    %v197 = vld [vmem:[#allocation7 + $0x18] sm:$0xf]
    %v198 = vld [vmem:[#allocation7 + $0x1c] sm:$0xf]
    %v199 = vld [vmem:[#allocation7 + $0x20] sm:$0xf]
    %v200 = vld [vmem:[#allocation7 + $0x24] sm:$0xf]
    %v201 = vld [vmem:[#allocation7 + $0x28] sm:$0xf]
    %v202 = vld [vmem:[#allocation7 + $0x2c] sm:$0xf]
    %v203 = vld [vmem:[#allocation7 + $0x30] sm:$0xf]
    %v204 = vld [vmem:[#allocation7 + $0x34] sm:$0xf]
    %v205 = vld [vmem:[#allocation7 + $0x38] sm:$0xf]
    %v206 = vld [vmem:[#allocation7 + $0x3c] sm:$0xf]
    %v207 = vld [vmem:[#allocation8] sm:$0x1]
    %v209 = vperm.slane %v207, 0
    %v227 = vunpack.c.l.b16 %v175
    %v228 = vunpack.c.l.b16 %v176
    %v229 = vunpack.c.l.b16 %v177
    %v230 = vunpack.c.l.b16 %v178
    %v231 = vunpack.c.l.b16 %v179
    %v232 = vunpack.c.l.b16 %v180
    %v233 = vunpack.c.l.b16 %v181
    %v234 = vunpack.c.l.b16 %v182
    %v235 = vunpack.c.l.b16 %v183
    %v236 = vunpack.c.l.b16 %v184
    %v237 = vunpack.c.l.b16 %v185
    %v238 = vunpack.c.l.b16 %v186
    %v239 = vunpack.c.l.b16 %v187
    %v240 = vunpack.c.l.b16 %v188
    %v241 = vunpack.c.l.b16 %v189
    %v242 = vunpack.c.l.b16 %v190
    %v243 = vpack.c.b16 %v228, %v227
    %v244 = vpack.c.b16 %v230, %v229
    %v245 = vpack.c.b16 %v232, %v231
    %v246 = vpack.c.b16 %v234, %v233
    %v247 = vpack.c.b16 %v236, %v235
    %v248 = vpack.c.b16 %v238, %v237
    %v249 = vpack.c.b16 %v240, %v239
    %v250 = vpack.c.b16 %v242, %v241
    %v275 = vunpack.c.l.b16 %v191
    %v276 = vunpack.c.l.b16 %v192
    %v277 = vunpack.c.l.b16 %v193
    %v278 = vunpack.c.l.b16 %v194
    %v279 = vunpack.c.l.b16 %v195
    %v280 = vunpack.c.l.b16 %v196
    %v281 = vunpack.c.l.b16 %v197
    %v282 = vunpack.c.l.b16 %v198
    %v283 = vunpack.c.l.b16 %v199
    %v284 = vunpack.c.l.b16 %v200
    %v285 = vunpack.c.l.b16 %v201
    %v286 = vunpack.c.l.b16 %v202
    %v287 = vunpack.c.l.b16 %v203
    %v288 = vunpack.c.l.b16 %v204
    %v289 = vunpack.c.l.b16 %v205
    %v290 = vunpack.c.l.b16 %v206
    %v291 = vpack.c.b16 %v276, %v275
    %v292 = vpack.c.b16 %v278, %v277
    %v293 = vpack.c.b16 %v280, %v279
    %v294 = vpack.c.b16 %v282, %v281
    %v295 = vpack.c.b16 %v284, %v283
    %v296 = vpack.c.b16 %v286, %v285
    %v297 = vpack.c.b16 %v288, %v287
    %v298 = vpack.c.b16 %v290, %v289
    %307 = vmatpush.bf16.msra.mxu0 %v298
    %308 = vmatpush.bf16.msra.mxu0 %v297
    %309 = vmatpush.bf16.msra.mxu0 %v296
    %310 = vmatpush.bf16.msra.mxu0 %v295
    %311 = vmatpush.bf16.msra.mxu0 %v294
    %312 = vmatpush.bf16.msra.mxu0 %v293
    %313 = vmatpush.bf16.msra.mxu0 %v292
    %314 = vmatpush.bf16.msra.mxu0 %v291
    %315 = vmatmul.bf16.gmra.mxu0 %v243
    %v316 = vpop.f32.mrf.mxu0
    %v317 = vadd.f32 %v209, %v316
    %v318 = vpop.f32.mrf.mxu0
    %v319 = vadd.f32 %v209, %v318
    %320 = vmatmul.bf16.gmra.mxu0 %v244
    %v321 = vpop.f32.mrf.mxu0
    %v322 = vadd.f32 %v209, %v321
    %v323 = vpop.f32.mrf.mxu0
    %v324 = vadd.f32 %v209, %v323
    %325 = vmatmul.bf16.gmra.mxu0 %v245
    %v326 = vpop.f32.mrf.mxu0
    %v327 = vadd.f32 %v209, %v326
    %v328 = vpop.f32.mrf.mxu0
    %v329 = vadd.f32 %v209, %v328
    %330 = vmatmul.bf16.gmra.mxu0 %v246
    %v331 = vpop.f32.mrf.mxu0
    %v332 = vadd.f32 %v209, %v331
    %v333 = vpop.f32.mrf.mxu0
    %v334 = vadd.f32 %v209, %v333
    %335 = vmatmul.bf16.gmra.mxu0 %v247
    %v336 = vpop.f32.mrf.mxu0
    %v337 = vadd.f32 %v209, %v336
    %v338 = vpop.f32.mrf.mxu0
    %v339 = vadd.f32 %v209, %v338
    %340 = vmatmul.bf16.gmra.mxu0 %v248
    %v341 = vpop.f32.mrf.mxu0
    %v342 = vadd.f32 %v209, %v341
    %v343 = vpop.f32.mrf.mxu0
    %v344 = vadd.f32 %v209, %v343
    %345 = vmatmul.bf16.gmra.mxu0 %v249
    %v346 = vpop.f32.mrf.mxu0
    %v347 = vadd.f32 %v209, %v346
    %v348 = vpop.f32.mrf.mxu0
    %v349 = vadd.f32 %v209, %v348
    %350 = vmatmul.bf16.gmra.mxu0 %v250
    %v351 = vpop.f32.mrf.mxu0
    %v352 = vadd.f32 %v209, %v351
    %v353 = vpop.f32.mrf.mxu0
    %v354 = vadd.f32 %v209, %v353
    %355 = vdwg.mxu0
    %v356 = vpack.c.bf16 %v319, %v317
    %v357 = vpack.c.bf16 %v324, %v322
    %v358 = vpack.c.bf16 %v329, %v327
    %v359 = vpack.c.bf16 %v334, %v332
    %v360 = vpack.c.bf16 %v339, %v337
    %v361 = vpack.c.bf16 %v344, %v342
    %v362 = vpack.c.bf16 %v349, %v347
    %v363 = vpack.c.bf16 %v354, %v352
    %v364 = vld [vmem:[#allocation2] sm:$0xf]
    %v365 = vld [vmem:[#allocation2 + $0x4] sm:$0xf]
    %v366 = vld [vmem:[#allocation2 + $0x8] sm:$0xf]
    %v367 = vld [vmem:[#allocation2 + $0xc] sm:$0xf]
    %v368 = vld [vmem:[#allocation2 + $0x10] sm:$0xf]
    %v369 = vld [vmem:[#allocation2 + $0x14] sm:$0xf]
    %v370 = vld [vmem:[#allocation2 + $0x18] sm:$0xf]
    %v371 = vld [vmem:[#allocation2 + $0x1c] sm:$0xf]
    %v372 = vld [vmem:[#allocation2 + $0x20] sm:$0xf]
    %v373 = vld [vmem:[#allocation2 + $0x24] sm:$0xf]
    %v374 = vld [vmem:[#allocation2 + $0x28] sm:$0xf]
    %v375 = vld [vmem:[#allocation2 + $0x2c] sm:$0xf]
    %v376 = vld [vmem:[#allocation2 + $0x30] sm:$0xf]
    %v377 = vld [vmem:[#allocation2 + $0x34] sm:$0xf]
    %v378 = vld [vmem:[#allocation2 + $0x38] sm:$0xf]
    %v379 = vld [vmem:[#allocation2 + $0x3c] sm:$0xf]
    %v396 = vunpack.c.l.b16 %v364
    %v397 = vunpack.c.l.b16 %v365
    %v398 = vunpack.c.l.b16 %v366
    %v399 = vunpack.c.l.b16 %v367
    %v400 = vunpack.c.l.b16 %v368
    %v401 = vunpack.c.l.b16 %v369
    %v402 = vunpack.c.l.b16 %v370
    %v403 = vunpack.c.l.b16 %v371
    %v404 = vunpack.c.l.b16 %v372
    %v405 = vunpack.c.l.b16 %v373
    %v406 = vunpack.c.l.b16 %v374
    %v407 = vunpack.c.l.b16 %v375
    %v408 = vunpack.c.l.b16 %v376
    %v409 = vunpack.c.l.b16 %v377
    %v410 = vunpack.c.l.b16 %v378
    %v411 = vunpack.c.l.b16 %v379
    %v412 = vpack.c.b16 %v397, %v396
    %v413 = vpack.c.b16 %v399, %v398
    %v414 = vpack.c.b16 %v401, %v400
    %v415 = vpack.c.b16 %v403, %v402
    %v416 = vpack.c.b16 %v405, %v404
    %v417 = vpack.c.b16 %v407, %v406
    %v418 = vpack.c.b16 %v409, %v408
    %v419 = vpack.c.b16 %v411, %v410
    %428 = vmatpush.bf16.msra.mxu0 %v363
    %429 = vmatpush.bf16.msra.mxu0 %v362
    %430 = vmatpush.bf16.msra.mxu0 %v361
    %431 = vmatpush.bf16.msra.mxu0 %v360
    %432 = vmatpush.bf16.msra.mxu0 %v359
    %433 = vmatpush.bf16.msra.mxu0 %v358
    %434 = vmatpush.bf16.msra.mxu0 %v357
    %435 = vmatpush.bf16.msra.mxu0 %v356
    %436 = vmatmul.bf16.gmra.mxu0 %v412
    %v437 = vpop.f32.mrf.mxu0
    %v438 = vadd.f32 0.0, %v437
    %v439 = vpop.f32.mrf.mxu0
    %v440 = vadd.f32 0.0, %v439
    %441 = vmatmul.bf16.gmra.mxu0 %v413
    %v442 = vpop.f32.mrf.mxu0
    %v443 = vadd.f32 0.0, %v442
    %v444 = vpop.f32.mrf.mxu0
    %v445 = vadd.f32 0.0, %v444
    %446 = vmatmul.bf16.gmra.mxu0 %v414
    %v447 = vpop.f32.mrf.mxu0
    %v448 = vadd.f32 0.0, %v447
    %v449 = vpop.f32.mrf.mxu0
    %v450 = vadd.f32 0.0, %v449
    %451 = vmatmul.bf16.gmra.mxu0 %v415
    %v452 = vpop.f32.mrf.mxu0
    %v453 = vadd.f32 0.0, %v452
    %v454 = vpop.f32.mrf.mxu0
    %v455 = vadd.f32 0.0, %v454
    %456 = vmatmul.bf16.gmra.mxu0 %v416
    %v457 = vpop.f32.mrf.mxu0
    %v458 = vadd.f32 0.0, %v457
    %v459 = vpop.f32.mrf.mxu0
    %v460 = vadd.f32 0.0, %v459
    %461 = vmatmul.bf16.gmra.mxu0 %v417
    %v462 = vpop.f32.mrf.mxu0
    %v463 = vadd.f32 0.0, %v462
    %v464 = vpop.f32.mrf.mxu0
    %v465 = vadd.f32 0.0, %v464
    %466 = vmatmul.bf16.gmra.mxu0 %v418
    %v467 = vpop.f32.mrf.mxu0
    %v468 = vadd.f32 0.0, %v467
    %v469 = vpop.f32.mrf.mxu0
    %v470 = vadd.f32 0.0, %v469
    %471 = vmatmul.bf16.gmra.mxu0 %v419
    %v472 = vpop.f32.mrf.mxu0
    %v473 = vadd.f32 0.0, %v472
    %v474 = vpop.f32.mrf.mxu0
    %v475 = vadd.f32 0.0, %v474
    %476 = vdwg.mxu0
    %v477 = vpack.c.bf16 %v440, %v438
    %v478 = vpack.c.bf16 %v445, %v443
    %v479 = vpack.c.bf16 %v450, %v448
    %v480 = vpack.c.bf16 %v455, %v453
    %v481 = vpack.c.bf16 %v460, %v458
    %v482 = vpack.c.bf16 %v465, %v463
    %v483 = vpack.c.bf16 %v470, %v468
    %v484 = vpack.c.bf16 %v475, %v473
    %v485 = vld [vmem:[#allocation10] sm:$0xf]
    %v486 = vld [vmem:[#allocation10 + $0x4] sm:$0xf]
    %v487 = vld [vmem:[#allocation10 + $0x8] sm:$0xf]
    %v488 = vld [vmem:[#allocation10 + $0xc] sm:$0xf]
    %v489 = vld [vmem:[#allocation10 + $0x10] sm:$0xf]
    %v490 = vld [vmem:[#allocation10 + $0x14] sm:$0xf]
    %v491 = vld [vmem:[#allocation10 + $0x18] sm:$0xf]
    %v492 = vld [vmem:[#allocation10 + $0x1c] sm:$0xf]
    %v493 = vld [vmem:[#allocation10 + $0x20] sm:$0xf]
    %v494 = vld [vmem:[#allocation10 + $0x24] sm:$0xf]
    %v495 = vld [vmem:[#allocation10 + $0x28] sm:$0xf]
    %v496 = vld [vmem:[#allocation10 + $0x2c] sm:$0xf]
    %v497 = vld [vmem:[#allocation10 + $0x30] sm:$0xf]
    %v498 = vld [vmem:[#allocation10 + $0x34] sm:$0xf]
    %v499 = vld [vmem:[#allocation10 + $0x38] sm:$0xf]
    %v500 = vld [vmem:[#allocation10 + $0x3c] sm:$0xf]
    %v501 = vld [vmem:[%s5] sm:$0x1]
    %v503 = vperm.slane %v501, 0
    %v521 = vunpack.c.l.b16 %v485
    %v522 = vunpack.c.l.b16 %v486
    %v523 = vunpack.c.l.b16 %v487
    %v524 = vunpack.c.l.b16 %v488
    %v525 = vunpack.c.l.b16 %v489
    %v526 = vunpack.c.l.b16 %v490
    %v527 = vunpack.c.l.b16 %v491
    %v528 = vunpack.c.l.b16 %v492
    %v529 = vunpack.c.l.b16 %v493
    %v530 = vunpack.c.l.b16 %v494
    %v531 = vunpack.c.l.b16 %v495
    %v532 = vunpack.c.l.b16 %v496
    %v533 = vunpack.c.l.b16 %v497
    %v534 = vunpack.c.l.b16 %v498
    %v535 = vunpack.c.l.b16 %v499
    %v536 = vunpack.c.l.b16 %v500
    %v537 = vpack.c.b16 %v522, %v521
    %v538 = vpack.c.b16 %v524, %v523
    %v539 = vpack.c.b16 %v526, %v525
    %v540 = vpack.c.b16 %v528, %v527
    %v541 = vpack.c.b16 %v530, %v529
    %v542 = vpack.c.b16 %v532, %v531
    %v543 = vpack.c.b16 %v534, %v533
    %v544 = vpack.c.b16 %v536, %v535
    %553 = vmatpush.bf16.msra.mxu0 %v544
    %554 = vmatpush.bf16.msra.mxu0 %v543
    %555 = vmatpush.bf16.msra.mxu0 %v542
    %556 = vmatpush.bf16.msra.mxu0 %v541
    %557 = vmatpush.bf16.msra.mxu0 %v540
    %558 = vmatpush.bf16.msra.mxu0 %v539
    %559 = vmatpush.bf16.msra.mxu0 %v538
    %560 = vmatpush.bf16.msra.mxu0 %v537
    %561 = vmatmul.bf16.gmra.mxu0 %v477
    %v562 = vpop.f32.mrf.mxu0
    %v563 = vadd.f32 %v503, %v562
    %v564 = vpop.f32.mrf.mxu0
    %v565 = vadd.f32 %v503, %v564
    %566 = vmatmul.bf16.gmra.mxu0 %v478
    %v567 = vpop.f32.mrf.mxu0
    %v568 = vadd.f32 %v503, %v567
    %v569 = vpop.f32.mrf.mxu0
    %v570 = vadd.f32 %v503, %v569
    %571 = vmatmul.bf16.gmra.mxu0 %v479
    %v572 = vpop.f32.mrf.mxu0
    %v573 = vadd.f32 %v503, %v572
    %v574 = vpop.f32.mrf.mxu0
    %v575 = vadd.f32 %v503, %v574
    %576 = vmatmul.bf16.gmra.mxu0 %v480
    %v577 = vpop.f32.mrf.mxu0
    %v578 = vadd.f32 %v503, %v577
    %v579 = vpop.f32.mrf.mxu0
    %v580 = vadd.f32 %v503, %v579
    %581 = vmatmul.bf16.gmra.mxu0 %v481
    %v582 = vpop.f32.mrf.mxu0
    %v583 = vadd.f32 %v503, %v582
    %v584 = vpop.f32.mrf.mxu0
    %v585 = vadd.f32 %v503, %v584
    %586 = vmatmul.bf16.gmra.mxu0 %v482
    %v587 = vpop.f32.mrf.mxu0
    %v588 = vadd.f32 %v503, %v587
    %v589 = vpop.f32.mrf.mxu0
    %v590 = vadd.f32 %v503, %v589
    %591 = vmatmul.bf16.gmra.mxu0 %v483
    %v592 = vpop.f32.mrf.mxu0
    %v593 = vadd.f32 %v503, %v592
    %v594 = vpop.f32.mrf.mxu0
    %v595 = vadd.f32 %v503, %v594
    %596 = vmatmul.bf16.gmra.mxu0 %v484
    %v597 = vpop.f32.mrf.mxu0
    %v598 = vadd.f32 %v503, %v597
    %v599 = vpop.f32.mrf.mxu0
    %v600 = vadd.f32 %v503, %v599
    %601 = vdwg.mxu0
    %v602 = vmax.f32 %v563, 0.0
    %v603 = vmax.f32 %v565, 0.0
    %v604 = vmax.f32 %v568, 0.0
    %v605 = vmax.f32 %v570, 0.0
    %v606 = vmax.f32 %v573, 0.0
    %v607 = vmax.f32 %v575, 0.0
    %v608 = vmax.f32 %v578, 0.0
    %v609 = vmax.f32 %v580, 0.0
    %v610 = vmax.f32 %v583, 0.0
    %v611 = vmax.f32 %v585, 0.0
    %v612 = vmax.f32 %v588, 0.0
    %v613 = vmax.f32 %v590, 0.0
    %v614 = vmax.f32 %v593, 0.0
    %v615 = vmax.f32 %v595, 0.0
    %v616 = vmax.f32 %v598, 0.0
    %v617 = vmax.f32 %v600, 0.0
    %v618 = vpack.c.bf16 %v603, %v602
    %v619 = vpack.c.bf16 %v605, %v604
    %v620 = vpack.c.bf16 %v607, %v606
    %v621 = vpack.c.bf16 %v609, %v608
    %v622 = vpack.c.bf16 %v611, %v610
    %v623 = vpack.c.bf16 %v613, %v612
    %v624 = vpack.c.bf16 %v615, %v614
    %v625 = vpack.c.bf16 %v617, %v616
    %v626 = vld [vmem:[#allocation11] sm:$0xf]
    %v627 = vld [vmem:[#allocation11 + $0x4] sm:$0xf]
    %v628 = vld [vmem:[#allocation11 + $0x8] sm:$0xf]
    %v629 = vld [vmem:[#allocation11 + $0xc] sm:$0xf]
    %v630 = vld [vmem:[#allocation11 + $0x10] sm:$0xf]
    %v631 = vld [vmem:[#allocation11 + $0x14] sm:$0xf]
    %v632 = vld [vmem:[#allocation11 + $0x18] sm:$0xf]
    %v633 = vld [vmem:[#allocation11 + $0x1c] sm:$0xf]
    %v634 = vld [vmem:[#allocation11 + $0x20] sm:$0xf]
    %v635 = vld [vmem:[#allocation11 + $0x24] sm:$0xf]
    %v636 = vld [vmem:[#allocation11 + $0x28] sm:$0xf]
    %v637 = vld [vmem:[#allocation11 + $0x2c] sm:$0xf]
    %v638 = vld [vmem:[#allocation11 + $0x30] sm:$0xf]
    %v639 = vld [vmem:[#allocation11 + $0x34] sm:$0xf]
    %v640 = vld [vmem:[#allocation11 + $0x38] sm:$0xf]
    %v641 = vld [vmem:[#allocation11 + $0x3c] sm:$0xf]
    %v642 = vld [vmem:[#allocation13] sm:$0x1]
    %v644 = vperm.slane %v642, 0
    %v662 = vunpack.c.l.b16 %v626
    %v663 = vunpack.c.l.b16 %v627
    %v664 = vunpack.c.l.b16 %v628
    %v665 = vunpack.c.l.b16 %v629
    %v666 = vunpack.c.l.b16 %v630
    %v667 = vunpack.c.l.b16 %v631
    %v668 = vunpack.c.l.b16 %v632
    %v669 = vunpack.c.l.b16 %v633
    %v670 = vunpack.c.l.b16 %v634
    %v671 = vunpack.c.l.b16 %v635
    %v672 = vunpack.c.l.b16 %v636
    %v673 = vunpack.c.l.b16 %v637
    %v674 = vunpack.c.l.b16 %v638
    %v675 = vunpack.c.l.b16 %v639
    %v676 = vunpack.c.l.b16 %v640
    %v677 = vunpack.c.l.b16 %v641
    %v678 = vpack.c.b16 %v663, %v662
    %v679 = vpack.c.b16 %v665, %v664
    %v680 = vpack.c.b16 %v667, %v666
    %v681 = vpack.c.b16 %v669, %v668
    %v682 = vpack.c.b16 %v671, %v670
    %v683 = vpack.c.b16 %v673, %v672
    %v684 = vpack.c.b16 %v675, %v674
    %v685 = vpack.c.b16 %v677, %v676
    %694 = vmatpush.bf16.msra.mxu0 %v685
    %695 = vmatpush.bf16.msra.mxu0 %v684
    %696 = vmatpush.bf16.msra.mxu0 %v683
    %697 = vmatpush.bf16.msra.mxu0 %v682
    %698 = vmatpush.bf16.msra.mxu0 %v681
    %699 = vmatpush.bf16.msra.mxu0 %v680
    %700 = vmatpush.bf16.msra.mxu0 %v679
    %701 = vmatpush.bf16.msra.mxu0 %v678
    %702 = vmatmul.bf16.gmra.mxu0 %v618
    %v703 = vpop.f32.mrf.mxu0
    %v704 = vadd.f32 %v644, %v703
    %v705 = vpop.f32.mrf.mxu0
    %v706 = vadd.f32 %v644, %v705
    %707 = vmatmul.bf16.gmra.mxu0 %v619
    %v708 = vpop.f32.mrf.mxu0
    %v709 = vadd.f32 %v644, %v708
    %v710 = vpop.f32.mrf.mxu0
    %v711 = vadd.f32 %v644, %v710
    %712 = vmatmul.bf16.gmra.mxu0 %v620
    %v713 = vpop.f32.mrf.mxu0
    %v714 = vadd.f32 %v644, %v713
    %v715 = vpop.f32.mrf.mxu0
    %v716 = vadd.f32 %v644, %v715
    %717 = vmatmul.bf16.gmra.mxu0 %v621
    %v718 = vpop.f32.mrf.mxu0
    %v719 = vadd.f32 %v644, %v718
    %v720 = vpop.f32.mrf.mxu0
    %v721 = vadd.f32 %v644, %v720
    %722 = vmatmul.bf16.gmra.mxu0 %v622
    %v723 = vpop.f32.mrf.mxu0
    %v724 = vadd.f32 %v644, %v723
    %v725 = vpop.f32.mrf.mxu0
    %v726 = vadd.f32 %v644, %v725
    %727 = vmatmul.bf16.gmra.mxu0 %v623
    %v728 = vpop.f32.mrf.mxu0
    %v729 = vadd.f32 %v644, %v728
    %v730 = vpop.f32.mrf.mxu0
    %v731 = vadd.f32 %v644, %v730
    %732 = vmatmul.bf16.gmra.mxu0 %v624
    %v733 = vpop.f32.mrf.mxu0
    %v734 = vadd.f32 %v644, %v733
    %v735 = vpop.f32.mrf.mxu0
    %v736 = vadd.f32 %v644, %v735
    %737 = vmatmul.bf16.gmra.mxu0 %v625
    %v738 = vpop.f32.mrf.mxu0
    %v739 = vadd.f32 %v644, %v738
    %v740 = vpop.f32.mrf.mxu0
    %v741 = vadd.f32 %v644, %v740
    %742 = vdwg.mxu0
    %v743 = vmax.f32 %v704, 0.0
    %v744 = vmax.f32 %v706, 0.0
    %v745 = vmax.f32 %v709, 0.0
    %v746 = vmax.f32 %v711, 0.0
    %v747 = vmax.f32 %v714, 0.0
    %v748 = vmax.f32 %v716, 0.0
    %v749 = vmax.f32 %v719, 0.0
    %v750 = vmax.f32 %v721, 0.0
    %v751 = vmax.f32 %v724, 0.0
    %v752 = vmax.f32 %v726, 0.0
    %v753 = vmax.f32 %v729, 0.0
    %v754 = vmax.f32 %v731, 0.0
    %v755 = vmax.f32 %v734, 0.0
    %v756 = vmax.f32 %v736, 0.0
    %v757 = vmax.f32 %v739, 0.0
    %v758 = vmax.f32 %v741, 0.0
    %v759 = vpack.c.bf16 %v744, %v743
    %v760 = vpack.c.bf16 %v746, %v745
    %v761 = vpack.c.bf16 %v748, %v747
    %v762 = vpack.c.bf16 %v750, %v749
    %v763 = vpack.c.bf16 %v752, %v751
    %v764 = vpack.c.bf16 %v754, %v753
    %v765 = vpack.c.bf16 %v756, %v755
    %v766 = vpack.c.bf16 %v758, %v757
    %767 = vmatpush.bf16.msra.mxu0 %v766
    %768 = vmatpush.bf16.msra.mxu0 %v765
    %769 = vmatpush.bf16.msra.mxu0 %v764
    %770 = vmatpush.bf16.msra.mxu0 %v763
    %771 = vmatpush.bf16.msra.mxu0 %v762
    %772 = vmatpush.bf16.msra.mxu0 %v761
    %773 = vmatpush.bf16.msra.mxu0 %v760
    %774 = vmatpush.bf16.msra.mxu0 %v759
    %775 = vmatmul.bf16.gmra.mxu0 %v412
    %v776 = vpop.f32.mrf.mxu0
    %v777 = vadd.f32 0.0, %v776
    %v778 = vpop.f32.mrf.mxu0
    %v779 = vadd.f32 0.0, %v778
    %780 = vmatmul.bf16.gmra.mxu0 %v413
    %v781 = vpop.f32.mrf.mxu0
    %v782 = vadd.f32 0.0, %v781
    %v783 = vpop.f32.mrf.mxu0
    %v784 = vadd.f32 0.0, %v783
    %785 = vmatmul.bf16.gmra.mxu0 %v414
    %v786 = vpop.f32.mrf.mxu0
    %v787 = vadd.f32 0.0, %v786
    %v788 = vpop.f32.mrf.mxu0
    %v789 = vadd.f32 0.0, %v788
    %790 = vmatmul.bf16.gmra.mxu0 %v415
    %v791 = vpop.f32.mrf.mxu0
    %v792 = vadd.f32 0.0, %v791
    %v793 = vpop.f32.mrf.mxu0
    %v794 = vadd.f32 0.0, %v793
    %795 = vmatmul.bf16.gmra.mxu0 %v416
    %v796 = vpop.f32.mrf.mxu0
    %v797 = vadd.f32 0.0, %v796
    %v798 = vpop.f32.mrf.mxu0
    %v799 = vadd.f32 0.0, %v798
    %800 = vmatmul.bf16.gmra.mxu0 %v417
    %v801 = vpop.f32.mrf.mxu0
    %v802 = vadd.f32 0.0, %v801
    %v803 = vpop.f32.mrf.mxu0
    %v804 = vadd.f32 0.0, %v803
    %805 = vmatmul.bf16.gmra.mxu0 %v418
    %v806 = vpop.f32.mrf.mxu0
    %v807 = vadd.f32 0.0, %v806
    %v808 = vpop.f32.mrf.mxu0
    %v809 = vadd.f32 0.0, %v808
    %810 = vmatmul.bf16.gmra.mxu0 %v419
    %v811 = vpop.f32.mrf.mxu0
    %v812 = vadd.f32 0.0, %v811
    %v813 = vpop.f32.mrf.mxu0
    %v814 = vadd.f32 0.0, %v813
    %815 = vdwg.mxu0
    %v816 = vpack.c.bf16 %v779, %v777
    %v817 = vpack.c.bf16 %v784, %v782
    %v818 = vpack.c.bf16 %v789, %v787
    %v819 = vpack.c.bf16 %v794, %v792
    %v820 = vpack.c.bf16 %v799, %v797
    %v821 = vpack.c.bf16 %v804, %v802
    %v822 = vpack.c.bf16 %v809, %v807
    %v823 = vpack.c.bf16 %v814, %v812
    %s824 = scalar_lea.vmem [#allocation10], 64
    %v825 = vld [vmem:[%s824] sm:$0xf]
    %v826 = vld [vmem:[%s824 + $0x4] sm:$0xf]
    %v827 = vld [vmem:[%s824 + $0x8] sm:$0xf]
    %v828 = vld [vmem:[%s824 + $0xc] sm:$0xf]
    %v829 = vld [vmem:[%s824 + $0x10] sm:$0xf]
    %v830 = vld [vmem:[%s824 + $0x14] sm:$0xf]
    %v831 = vld [vmem:[%s824 + $0x18] sm:$0xf]
    %v832 = vld [vmem:[%s824 + $0x1c] sm:$0xf]
    %v833 = vld [vmem:[%s824 + $0x20] sm:$0xf]
    %v834 = vld [vmem:[%s824 + $0x24] sm:$0xf]
    %v835 = vld [vmem:[%s824 + $0x28] sm:$0xf]
    %v836 = vld [vmem:[%s824 + $0x2c] sm:$0xf]
    %v837 = vld [vmem:[%s824 + $0x30] sm:$0xf]
    %v838 = vld [vmem:[%s824 + $0x34] sm:$0xf]
    %v839 = vld [vmem:[%s824 + $0x38] sm:$0xf]
    %v840 = vld [vmem:[%s824 + $0x3c] sm:$0xf]
    %s841 = scalar_lea.vmem %s5, 1
    %v842 = vld [vmem:[%s841] sm:$0x1]
    %v844 = vperm.slane %v842, 0
    %v862 = vunpack.c.l.b16 %v825
    %v863 = vunpack.c.l.b16 %v826
    %v864 = vunpack.c.l.b16 %v827
    %v865 = vunpack.c.l.b16 %v828
    %v866 = vunpack.c.l.b16 %v829
    %v867 = vunpack.c.l.b16 %v830
    %v868 = vunpack.c.l.b16 %v831
    %v869 = vunpack.c.l.b16 %v832
    %v870 = vunpack.c.l.b16 %v833
    %v871 = vunpack.c.l.b16 %v834
    %v872 = vunpack.c.l.b16 %v835
    %v873 = vunpack.c.l.b16 %v836
    %v874 = vunpack.c.l.b16 %v837
    %v875 = vunpack.c.l.b16 %v838
    %v876 = vunpack.c.l.b16 %v839
    %v877 = vunpack.c.l.b16 %v840
    %v878 = vpack.c.b16 %v863, %v862
    %v879 = vpack.c.b16 %v865, %v864
    %v880 = vpack.c.b16 %v867, %v866
    %v881 = vpack.c.b16 %v869, %v868
    %v882 = vpack.c.b16 %v871, %v870
    %v883 = vpack.c.b16 %v873, %v872
    %v884 = vpack.c.b16 %v875, %v874
    %v885 = vpack.c.b16 %v877, %v876
    %894 = vmatpush.bf16.msra.mxu0 %v885
    %895 = vmatpush.bf16.msra.mxu0 %v884
    %896 = vmatpush.bf16.msra.mxu0 %v883
    %897 = vmatpush.bf16.msra.mxu0 %v882
    %898 = vmatpush.bf16.msra.mxu0 %v881
    %899 = vmatpush.bf16.msra.mxu0 %v880
    %900 = vmatpush.bf16.msra.mxu0 %v879
    %901 = vmatpush.bf16.msra.mxu0 %v878
    %902 = vmatmul.bf16.gmra.mxu0 %v816
    %v903 = vpop.f32.mrf.mxu0
    %v904 = vadd.f32 %v844, %v903
    %v905 = vpop.f32.mrf.mxu0
    %v906 = vadd.f32 %v844, %v905
    %907 = vmatmul.bf16.gmra.mxu0 %v817
    %v908 = vpop.f32.mrf.mxu0
    %v909 = vadd.f32 %v844, %v908
    %v910 = vpop.f32.mrf.mxu0
    %v911 = vadd.f32 %v844, %v910
    %912 = vmatmul.bf16.gmra.mxu0 %v818
    %v913 = vpop.f32.mrf.mxu0
    %v914 = vadd.f32 %v844, %v913
    %v915 = vpop.f32.mrf.mxu0
    %v916 = vadd.f32 %v844, %v915
    %917 = vmatmul.bf16.gmra.mxu0 %v819
    %v918 = vpop.f32.mrf.mxu0
    %v919 = vadd.f32 %v844, %v918
    %v920 = vpop.f32.mrf.mxu0
    %v921 = vadd.f32 %v844, %v920
    %922 = vmatmul.bf16.gmra.mxu0 %v820
    %v923 = vpop.f32.mrf.mxu0
    %v924 = vadd.f32 %v844, %v923
    %v925 = vpop.f32.mrf.mxu0
    %v926 = vadd.f32 %v844, %v925
    %927 = vmatmul.bf16.gmra.mxu0 %v821
    %v928 = vpop.f32.mrf.mxu0
    %v929 = vadd.f32 %v844, %v928
    %v930 = vpop.f32.mrf.mxu0
    %v931 = vadd.f32 %v844, %v930
    %932 = vmatmul.bf16.gmra.mxu0 %v822
    %v933 = vpop.f32.mrf.mxu0
    %v934 = vadd.f32 %v844, %v933
    %v935 = vpop.f32.mrf.mxu0
    %v936 = vadd.f32 %v844, %v935
    %937 = vmatmul.bf16.gmra.mxu0 %v823
    %v938 = vpop.f32.mrf.mxu0
    %v939 = vadd.f32 %v844, %v938
    %v940 = vpop.f32.mrf.mxu0
    %v941 = vadd.f32 %v844, %v940
    %942 = vdwg.mxu0
    %v943 = vmax.f32 %v904, 0.0
    %v944 = vmax.f32 %v906, 0.0
    %v945 = vmax.f32 %v909, 0.0
    %v946 = vmax.f32 %v911, 0.0
    %v947 = vmax.f32 %v914, 0.0
    %v948 = vmax.f32 %v916, 0.0
    %v949 = vmax.f32 %v919, 0.0
    %v950 = vmax.f32 %v921, 0.0
    %v951 = vmax.f32 %v924, 0.0
    %v952 = vmax.f32 %v926, 0.0
    %v953 = vmax.f32 %v929, 0.0
    %v954 = vmax.f32 %v931, 0.0
    %v955 = vmax.f32 %v934, 0.0
    %v956 = vmax.f32 %v936, 0.0
    %v957 = vmax.f32 %v939, 0.0
    %v958 = vmax.f32 %v941, 0.0
    %v959 = vpack.c.bf16 %v944, %v943
    %v960 = vpack.c.bf16 %v946, %v945
    %v961 = vpack.c.bf16 %v948, %v947
    %v962 = vpack.c.bf16 %v950, %v949
    %v963 = vpack.c.bf16 %v952, %v951
    %v964 = vpack.c.bf16 %v954, %v953
    %v965 = vpack.c.bf16 %v956, %v955
    %v966 = vpack.c.bf16 %v958, %v957
    %s967 = scalar_lea.vmem [#allocation11], 64
    %v968 = vld [vmem:[%s967] sm:$0xf]
    %v969 = vld [vmem:[%s967 + $0x4] sm:$0xf]
    %v970 = vld [vmem:[%s967 + $0x8] sm:$0xf]
    %v971 = vld [vmem:[%s967 + $0xc] sm:$0xf]
    %v972 = vld [vmem:[%s967 + $0x10] sm:$0xf]
    %v973 = vld [vmem:[%s967 + $0x14] sm:$0xf]
    %v974 = vld [vmem:[%s967 + $0x18] sm:$0xf]
    %v975 = vld [vmem:[%s967 + $0x1c] sm:$0xf]
    %v976 = vld [vmem:[%s967 + $0x20] sm:$0xf]
    %v977 = vld [vmem:[%s967 + $0x24] sm:$0xf]
    %v978 = vld [vmem:[%s967 + $0x28] sm:$0xf]
    %v979 = vld [vmem:[%s967 + $0x2c] sm:$0xf]
    %v980 = vld [vmem:[%s967 + $0x30] sm:$0xf]
    %v981 = vld [vmem:[%s967 + $0x34] sm:$0xf]
    %v982 = vld [vmem:[%s967 + $0x38] sm:$0xf]
    %v983 = vld [vmem:[%s967 + $0x3c] sm:$0xf]
    %s984 = scalar_lea.vmem [#allocation13], 1
    %v985 = vld [vmem:[%s984] sm:$0x1]
    %v987 = vperm.slane %v985, 0
    %v1005 = vunpack.c.l.b16 %v968
    %v1006 = vunpack.c.l.b16 %v969
    %v1007 = vunpack.c.l.b16 %v970
    %v1008 = vunpack.c.l.b16 %v971
    %v1009 = vunpack.c.l.b16 %v972
    %v1010 = vunpack.c.l.b16 %v973
    %v1011 = vunpack.c.l.b16 %v974
    %v1012 = vunpack.c.l.b16 %v975
    %v1013 = vunpack.c.l.b16 %v976
    %v1014 = vunpack.c.l.b16 %v977
    %v1015 = vunpack.c.l.b16 %v978
    %v1016 = vunpack.c.l.b16 %v979
    %v1017 = vunpack.c.l.b16 %v980
    %v1018 = vunpack.c.l.b16 %v981
    %v1019 = vunpack.c.l.b16 %v982
    %v1020 = vunpack.c.l.b16 %v983
    %v1021 = vpack.c.b16 %v1006, %v1005
    %v1022 = vpack.c.b16 %v1008, %v1007
    %v1023 = vpack.c.b16 %v1010, %v1009
    %v1024 = vpack.c.b16 %v1012, %v1011
    %v1025 = vpack.c.b16 %v1014, %v1013
    %v1026 = vpack.c.b16 %v1016, %v1015
    %v1027 = vpack.c.b16 %v1018, %v1017
    %v1028 = vpack.c.b16 %v1020, %v1019
    %1037 = vmatpush.bf16.msra.mxu0 %v1028
    %1038 = vmatpush.bf16.msra.mxu0 %v1027
    %1039 = vmatpush.bf16.msra.mxu0 %v1026
    %1040 = vmatpush.bf16.msra.mxu0 %v1025
    %1041 = vmatpush.bf16.msra.mxu0 %v1024
    %1042 = vmatpush.bf16.msra.mxu0 %v1023
    %1043 = vmatpush.bf16.msra.mxu0 %v1022
    %1044 = vmatpush.bf16.msra.mxu0 %v1021
    %1045 = vmatmul.bf16.gmra.mxu0 %v959
    %v1046 = vpop.f32.mrf.mxu0
    %v1047 = vadd.f32 %v987, %v1046
    %v1048 = vpop.f32.mrf.mxu0
    %v1049 = vadd.f32 %v987, %v1048
    %1050 = vmatmul.bf16.gmra.mxu0 %v960
    %v1051 = vpop.f32.mrf.mxu0
    %v1052 = vadd.f32 %v987, %v1051
    %v1053 = vpop.f32.mrf.mxu0
    %v1054 = vadd.f32 %v987, %v1053
    %1055 = vmatmul.bf16.gmra.mxu0 %v961
    %v1056 = vpop.f32.mrf.mxu0
    %v1057 = vadd.f32 %v987, %v1056
    %v1058 = vpop.f32.mrf.mxu0
    %v1059 = vadd.f32 %v987, %v1058
    %1060 = vmatmul.bf16.gmra.mxu0 %v962
    %v1061 = vpop.f32.mrf.mxu0
    %v1062 = vadd.f32 %v987, %v1061
    %v1063 = vpop.f32.mrf.mxu0
    %v1064 = vadd.f32 %v987, %v1063
    %1065 = vmatmul.bf16.gmra.mxu0 %v963
    %v1066 = vpop.f32.mrf.mxu0
    %v1067 = vadd.f32 %v987, %v1066
    %v1068 = vpop.f32.mrf.mxu0
    %v1069 = vadd.f32 %v987, %v1068
    %1070 = vmatmul.bf16.gmra.mxu0 %v964
    %v1071 = vpop.f32.mrf.mxu0
    %v1072 = vadd.f32 %v987, %v1071
    %v1073 = vpop.f32.mrf.mxu0
    %v1074 = vadd.f32 %v987, %v1073
    %1075 = vmatmul.bf16.gmra.mxu0 %v965
    %v1076 = vpop.f32.mrf.mxu0
    %v1077 = vadd.f32 %v987, %v1076
    %v1078 = vpop.f32.mrf.mxu0
    %v1079 = vadd.f32 %v987, %v1078
    %1080 = vmatmul.bf16.gmra.mxu0 %v966
    %v1081 = vpop.f32.mrf.mxu0
    %v1082 = vadd.f32 %v987, %v1081
    %v1083 = vpop.f32.mrf.mxu0
    %v1084 = vadd.f32 %v987, %v1083
    %1085 = vdwg.mxu0
    %v1086 = vmax.f32 %v1047, 0.0
    %v1087 = vmax.f32 %v1049, 0.0
    %v1088 = vmax.f32 %v1052, 0.0
    %v1089 = vmax.f32 %v1054, 0.0
    %v1090 = vmax.f32 %v1057, 0.0
    %v1091 = vmax.f32 %v1059, 0.0
    %v1092 = vmax.f32 %v1062, 0.0
    %v1093 = vmax.f32 %v1064, 0.0
    %v1094 = vmax.f32 %v1067, 0.0
    %v1095 = vmax.f32 %v1069, 0.0
    %v1096 = vmax.f32 %v1072, 0.0
    %v1097 = vmax.f32 %v1074, 0.0
    %v1098 = vmax.f32 %v1077, 0.0
    %v1099 = vmax.f32 %v1079, 0.0
    %v1100 = vmax.f32 %v1082, 0.0
    %v1101 = vmax.f32 %v1084, 0.0
    %v1102 = vpack.c.bf16 %v1087, %v1086
    %v1103 = vpack.c.bf16 %v1089, %v1088
    %v1104 = vpack.c.bf16 %v1091, %v1090
    %v1105 = vpack.c.bf16 %v1093, %v1092
    %v1106 = vpack.c.bf16 %v1095, %v1094
    %v1107 = vpack.c.bf16 %v1097, %v1096
    %v1108 = vpack.c.bf16 %v1099, %v1098
    %v1109 = vpack.c.bf16 %v1101, %v1100
    %1110 = vmatpush.bf16.msra.mxu0 %v1109
    %1111 = vmatpush.bf16.msra.mxu0 %v1108
    %1112 = vmatpush.bf16.msra.mxu0 %v1107
    %1113 = vmatpush.bf16.msra.mxu0 %v1106
    %1114 = vmatpush.bf16.msra.mxu0 %v1105
    %1115 = vmatpush.bf16.msra.mxu0 %v1104
    %1116 = vmatpush.bf16.msra.mxu0 %v1103
    %1117 = vmatpush.bf16.msra.mxu0 %v1102
    %1118 = vmatmul.bf16.gmra.mxu0 %v412
    %v1119 = vpop.f32.mrf.mxu0
    %v1120 = vadd.f32 0.0, %v1119
    %v1121 = vpop.f32.mrf.mxu0
    %v1122 = vadd.f32 0.0, %v1121
    %1123 = vmatmul.bf16.gmra.mxu0 %v413
    %v1124 = vpop.f32.mrf.mxu0
    %v1125 = vadd.f32 0.0, %v1124
    %v1126 = vpop.f32.mrf.mxu0
    %v1127 = vadd.f32 0.0, %v1126
    %1128 = vmatmul.bf16.gmra.mxu0 %v414
    %v1129 = vpop.f32.mrf.mxu0
    %v1130 = vadd.f32 0.0, %v1129
    %v1131 = vpop.f32.mrf.mxu0
    %v1132 = vadd.f32 0.0, %v1131
    %1133 = vmatmul.bf16.gmra.mxu0 %v415
    %v1134 = vpop.f32.mrf.mxu0
    %v1135 = vadd.f32 0.0, %v1134
    %v1136 = vpop.f32.mrf.mxu0
    %v1137 = vadd.f32 0.0, %v1136
    %1138 = vmatmul.bf16.gmra.mxu0 %v416
    %v1139 = vpop.f32.mrf.mxu0
    %v1140 = vadd.f32 0.0, %v1139
    %v1141 = vpop.f32.mrf.mxu0
    %v1142 = vadd.f32 0.0, %v1141
    %1143 = vmatmul.bf16.gmra.mxu0 %v417
    %v1144 = vpop.f32.mrf.mxu0
    %v1145 = vadd.f32 0.0, %v1144
    %v1146 = vpop.f32.mrf.mxu0
    %v1147 = vadd.f32 0.0, %v1146
    %1148 = vmatmul.bf16.gmra.mxu0 %v418
    %v1149 = vpop.f32.mrf.mxu0
    %v1150 = vadd.f32 0.0, %v1149
    %v1151 = vpop.f32.mrf.mxu0
    %v1152 = vadd.f32 0.0, %v1151
    %1153 = vmatmul.bf16.gmra.mxu0 %v419
    %v1154 = vpop.f32.mrf.mxu0
    %v1155 = vadd.f32 0.0, %v1154
    %v1156 = vpop.f32.mrf.mxu0
    %v1157 = vadd.f32 0.0, %v1156
    %1158 = vdwg.mxu0
    %v1159 = vpack.c.bf16 %v1122, %v1120
    %v1160 = vpack.c.bf16 %v1127, %v1125
    %v1161 = vpack.c.bf16 %v1132, %v1130
    %v1162 = vpack.c.bf16 %v1137, %v1135
    %v1163 = vpack.c.bf16 %v1142, %v1140
    %v1164 = vpack.c.bf16 %v1147, %v1145
    %v1165 = vpack.c.bf16 %v1152, %v1150
    %v1166 = vpack.c.bf16 %v1157, %v1155
    %s1167 = scalar_lea.vmem [#allocation10], 128
    %v1168 = vld [vmem:[%s1167] sm:$0xf]
    %v1169 = vld [vmem:[%s1167 + $0x4] sm:$0xf]
    %v1170 = vld [vmem:[%s1167 + $0x8] sm:$0xf]
    %v1171 = vld [vmem:[%s1167 + $0xc] sm:$0xf]
    %v1172 = vld [vmem:[%s1167 + $0x10] sm:$0xf]
    %v1173 = vld [vmem:[%s1167 + $0x14] sm:$0xf]
    %v1174 = vld [vmem:[%s1167 + $0x18] sm:$0xf]
    %v1175 = vld [vmem:[%s1167 + $0x1c] sm:$0xf]
    %v1176 = vld [vmem:[%s1167 + $0x20] sm:$0xf]
    %v1177 = vld [vmem:[%s1167 + $0x24] sm:$0xf]
    %v1178 = vld [vmem:[%s1167 + $0x28] sm:$0xf]
    %v1179 = vld [vmem:[%s1167 + $0x2c] sm:$0xf]
    %v1180 = vld [vmem:[%s1167 + $0x30] sm:$0xf]
    %v1181 = vld [vmem:[%s1167 + $0x34] sm:$0xf]
    %v1182 = vld [vmem:[%s1167 + $0x38] sm:$0xf]
    %v1183 = vld [vmem:[%s1167 + $0x3c] sm:$0xf]
    %s1184 = scalar_lea.vmem %s5, 2
    %v1185 = vld [vmem:[%s1184] sm:$0x1]
    %v1187 = vperm.slane %v1185, 0
    %v1205 = vunpack.c.l.b16 %v1168
    %v1206 = vunpack.c.l.b16 %v1169
    %v1207 = vunpack.c.l.b16 %v1170
    %v1208 = vunpack.c.l.b16 %v1171
    %v1209 = vunpack.c.l.b16 %v1172
    %v1210 = vunpack.c.l.b16 %v1173
    %v1211 = vunpack.c.l.b16 %v1174
    %v1212 = vunpack.c.l.b16 %v1175
    %v1213 = vunpack.c.l.b16 %v1176
    %v1214 = vunpack.c.l.b16 %v1177
    %v1215 = vunpack.c.l.b16 %v1178
    %v1216 = vunpack.c.l.b16 %v1179
    %v1217 = vunpack.c.l.b16 %v1180
    %v1218 = vunpack.c.l.b16 %v1181
    %v1219 = vunpack.c.l.b16 %v1182
    %v1220 = vunpack.c.l.b16 %v1183
    %v1221 = vpack.c.b16 %v1206, %v1205
    %v1222 = vpack.c.b16 %v1208, %v1207
    %v1223 = vpack.c.b16 %v1210, %v1209
    %v1224 = vpack.c.b16 %v1212, %v1211
    %v1225 = vpack.c.b16 %v1214, %v1213
    %v1226 = vpack.c.b16 %v1216, %v1215
    %v1227 = vpack.c.b16 %v1218, %v1217
    %v1228 = vpack.c.b16 %v1220, %v1219
    %1237 = vmatpush.bf16.msra.mxu0 %v1228
    %1238 = vmatpush.bf16.msra.mxu0 %v1227
    %1239 = vmatpush.bf16.msra.mxu0 %v1226
    %1240 = vmatpush.bf16.msra.mxu0 %v1225
    %1241 = vmatpush.bf16.msra.mxu0 %v1224
    %1242 = vmatpush.bf16.msra.mxu0 %v1223
    %1243 = vmatpush.bf16.msra.mxu0 %v1222
    %1244 = vmatpush.bf16.msra.mxu0 %v1221
    %1245 = vmatmul.bf16.gmra.mxu0 %v1159
    %v1246 = vpop.f32.mrf.mxu0
    %v1247 = vadd.f32 %v1187, %v1246
    %v1248 = vpop.f32.mrf.mxu0
    %v1249 = vadd.f32 %v1187, %v1248
    %1250 = vmatmul.bf16.gmra.mxu0 %v1160
    %v1251 = vpop.f32.mrf.mxu0
    %v1252 = vadd.f32 %v1187, %v1251
    %v1253 = vpop.f32.mrf.mxu0
    %v1254 = vadd.f32 %v1187, %v1253
    %1255 = vmatmul.bf16.gmra.mxu0 %v1161
    %v1256 = vpop.f32.mrf.mxu0
    %v1257 = vadd.f32 %v1187, %v1256
    %v1258 = vpop.f32.mrf.mxu0
    %v1259 = vadd.f32 %v1187, %v1258
    %1260 = vmatmul.bf16.gmra.mxu0 %v1162
    %v1261 = vpop.f32.mrf.mxu0
    %v1262 = vadd.f32 %v1187, %v1261
    %v1263 = vpop.f32.mrf.mxu0
    %v1264 = vadd.f32 %v1187, %v1263
    %1265 = vmatmul.bf16.gmra.mxu0 %v1163
    %v1266 = vpop.f32.mrf.mxu0
    %v1267 = vadd.f32 %v1187, %v1266
    %v1268 = vpop.f32.mrf.mxu0
    %v1269 = vadd.f32 %v1187, %v1268
    %1270 = vmatmul.bf16.gmra.mxu0 %v1164
    %v1271 = vpop.f32.mrf.mxu0
    %v1272 = vadd.f32 %v1187, %v1271
    %v1273 = vpop.f32.mrf.mxu0
    %v1274 = vadd.f32 %v1187, %v1273
    %1275 = vmatmul.bf16.gmra.mxu0 %v1165
    %v1276 = vpop.f32.mrf.mxu0
    %v1277 = vadd.f32 %v1187, %v1276
    %v1278 = vpop.f32.mrf.mxu0
    %v1279 = vadd.f32 %v1187, %v1278
    %1280 = vmatmul.bf16.gmra.mxu0 %v1166
    %v1281 = vpop.f32.mrf.mxu0
    %v1282 = vadd.f32 %v1187, %v1281
    %v1283 = vpop.f32.mrf.mxu0
    %v1284 = vadd.f32 %v1187, %v1283
    %1285 = vdwg.mxu0
    %v1286 = vmax.f32 %v1247, 0.0
    %v1287 = vmax.f32 %v1249, 0.0
    %v1288 = vmax.f32 %v1252, 0.0
    %v1289 = vmax.f32 %v1254, 0.0
    %v1290 = vmax.f32 %v1257, 0.0
    %v1291 = vmax.f32 %v1259, 0.0
    %v1292 = vmax.f32 %v1262, 0.0
    %v1293 = vmax.f32 %v1264, 0.0
    %v1294 = vmax.f32 %v1267, 0.0
    %v1295 = vmax.f32 %v1269, 0.0
    %v1296 = vmax.f32 %v1272, 0.0
    %v1297 = vmax.f32 %v1274, 0.0
    %v1298 = vmax.f32 %v1277, 0.0
    %v1299 = vmax.f32 %v1279, 0.0
    %v1300 = vmax.f32 %v1282, 0.0
    %v1301 = vmax.f32 %v1284, 0.0
    %v1302 = vpack.c.bf16 %v1287, %v1286
    %v1303 = vpack.c.bf16 %v1289, %v1288
    %v1304 = vpack.c.bf16 %v1291, %v1290
    %v1305 = vpack.c.bf16 %v1293, %v1292
    %v1306 = vpack.c.bf16 %v1295, %v1294
    %v1307 = vpack.c.bf16 %v1297, %v1296
    %v1308 = vpack.c.bf16 %v1299, %v1298
    %v1309 = vpack.c.bf16 %v1301, %v1300
    %s1310 = scalar_lea.vmem [#allocation11], 128
    %v1311 = vld [vmem:[%s1310] sm:$0xf]
    %v1312 = vld [vmem:[%s1310 + $0x4] sm:$0xf]
    %v1313 = vld [vmem:[%s1310 + $0x8] sm:$0xf]
    %v1314 = vld [vmem:[%s1310 + $0xc] sm:$0xf]
    %v1315 = vld [vmem:[%s1310 + $0x10] sm:$0xf]
    %v1316 = vld [vmem:[%s1310 + $0x14] sm:$0xf]
    %v1317 = vld [vmem:[%s1310 + $0x18] sm:$0xf]
    %v1318 = vld [vmem:[%s1310 + $0x1c] sm:$0xf]
    %v1319 = vld [vmem:[%s1310 + $0x20] sm:$0xf]
    %v1320 = vld [vmem:[%s1310 + $0x24] sm:$0xf]
    %v1321 = vld [vmem:[%s1310 + $0x28] sm:$0xf]
    %v1322 = vld [vmem:[%s1310 + $0x2c] sm:$0xf]
    %v1323 = vld [vmem:[%s1310 + $0x30] sm:$0xf]
    %v1324 = vld [vmem:[%s1310 + $0x34] sm:$0xf]
    %v1325 = vld [vmem:[%s1310 + $0x38] sm:$0xf]
    %v1326 = vld [vmem:[%s1310 + $0x3c] sm:$0xf]
    %s1327 = scalar_lea.vmem [#allocation13], 2
    %v1328 = vld [vmem:[%s1327] sm:$0x1]
    %v1330 = vperm.slane %v1328, 0
    %v1348 = vunpack.c.l.b16 %v1311
    %v1349 = vunpack.c.l.b16 %v1312
    %v1350 = vunpack.c.l.b16 %v1313
    %v1351 = vunpack.c.l.b16 %v1314
    %v1352 = vunpack.c.l.b16 %v1315
    %v1353 = vunpack.c.l.b16 %v1316
    %v1354 = vunpack.c.l.b16 %v1317
    %v1355 = vunpack.c.l.b16 %v1318
    %v1356 = vunpack.c.l.b16 %v1319
    %v1357 = vunpack.c.l.b16 %v1320
    %v1358 = vunpack.c.l.b16 %v1321
    %v1359 = vunpack.c.l.b16 %v1322
    %v1360 = vunpack.c.l.b16 %v1323
    %v1361 = vunpack.c.l.b16 %v1324
    %v1362 = vunpack.c.l.b16 %v1325
    %v1363 = vunpack.c.l.b16 %v1326
    %v1364 = vpack.c.b16 %v1349, %v1348
    %v1365 = vpack.c.b16 %v1351, %v1350
    %v1366 = vpack.c.b16 %v1353, %v1352
    %v1367 = vpack.c.b16 %v1355, %v1354
    %v1368 = vpack.c.b16 %v1357, %v1356
    %v1369 = vpack.c.b16 %v1359, %v1358
    %v1370 = vpack.c.b16 %v1361, %v1360
    %v1371 = vpack.c.b16 %v1363, %v1362
    %1380 = vmatpush.bf16.msra.mxu0 %v1371
    %1381 = vmatpush.bf16.msra.mxu0 %v1370
    %1382 = vmatpush.bf16.msra.mxu0 %v1369
    %1383 = vmatpush.bf16.msra.mxu0 %v1368
    %1384 = vmatpush.bf16.msra.mxu0 %v1367
    %1385 = vmatpush.bf16.msra.mxu0 %v1366
    %1386 = vmatpush.bf16.msra.mxu0 %v1365
    %1387 = vmatpush.bf16.msra.mxu0 %v1364
    %1388 = vmatmul.bf16.gmra.mxu0 %v1302
    %v1389 = vpop.f32.mrf.mxu0
    %v1390 = vadd.f32 %v1330, %v1389
    %v1391 = vpop.f32.mrf.mxu0
    %v1392 = vadd.f32 %v1330, %v1391
    %1393 = vmatmul.bf16.gmra.mxu0 %v1303
    %v1394 = vpop.f32.mrf.mxu0
    %v1395 = vadd.f32 %v1330, %v1394
    %v1396 = vpop.f32.mrf.mxu0
    %v1397 = vadd.f32 %v1330, %v1396
    %1398 = vmatmul.bf16.gmra.mxu0 %v1304
    %v1399 = vpop.f32.mrf.mxu0
    %v1400 = vadd.f32 %v1330, %v1399
    %v1401 = vpop.f32.mrf.mxu0
    %v1402 = vadd.f32 %v1330, %v1401
    %1403 = vmatmul.bf16.gmra.mxu0 %v1305
    %v1404 = vpop.f32.mrf.mxu0
    %v1405 = vadd.f32 %v1330, %v1404
    %v1406 = vpop.f32.mrf.mxu0
    %v1407 = vadd.f32 %v1330, %v1406
    %1408 = vmatmul.bf16.gmra.mxu0 %v1306
    %v1409 = vpop.f32.mrf.mxu0
    %v1410 = vadd.f32 %v1330, %v1409
    %v1411 = vpop.f32.mrf.mxu0
    %v1412 = vadd.f32 %v1330, %v1411
    %1413 = vmatmul.bf16.gmra.mxu0 %v1307
    %v1414 = vpop.f32.mrf.mxu0
    %v1415 = vadd.f32 %v1330, %v1414
    %v1416 = vpop.f32.mrf.mxu0
    %v1417 = vadd.f32 %v1330, %v1416
    %1418 = vmatmul.bf16.gmra.mxu0 %v1308
    %v1419 = vpop.f32.mrf.mxu0
    %v1420 = vadd.f32 %v1330, %v1419
    %v1421 = vpop.f32.mrf.mxu0
    %v1422 = vadd.f32 %v1330, %v1421
    %1423 = vmatmul.bf16.gmra.mxu0 %v1309
    %v1424 = vpop.f32.mrf.mxu0
    %v1425 = vadd.f32 %v1330, %v1424
    %v1426 = vpop.f32.mrf.mxu0
    %v1427 = vadd.f32 %v1330, %v1426
    %1428 = vdwg.mxu0
    %v1429 = vmax.f32 %v1390, 0.0
    %v1430 = vmax.f32 %v1392, 0.0
    %v1431 = vmax.f32 %v1395, 0.0
    %v1432 = vmax.f32 %v1397, 0.0
    %v1433 = vmax.f32 %v1400, 0.0
    %v1434 = vmax.f32 %v1402, 0.0
    %v1435 = vmax.f32 %v1405, 0.0
    %v1436 = vmax.f32 %v1407, 0.0
    %v1437 = vmax.f32 %v1410, 0.0
    %v1438 = vmax.f32 %v1412, 0.0
    %v1439 = vmax.f32 %v1415, 0.0
    %v1440 = vmax.f32 %v1417, 0.0
    %v1441 = vmax.f32 %v1420, 0.0
    %v1442 = vmax.f32 %v1422, 0.0
    %v1443 = vmax.f32 %v1425, 0.0
    %v1444 = vmax.f32 %v1427, 0.0
    %v1445 = vpack.c.bf16 %v1430, %v1429
    %v1446 = vpack.c.bf16 %v1432, %v1431
    %v1447 = vpack.c.bf16 %v1434, %v1433
    %v1448 = vpack.c.bf16 %v1436, %v1435
    %v1449 = vpack.c.bf16 %v1438, %v1437
    %v1450 = vpack.c.bf16 %v1440, %v1439
    %v1451 = vpack.c.bf16 %v1442, %v1441
    %v1452 = vpack.c.bf16 %v1444, %v1443
    %1453 = vmatpush.bf16.msra.mxu0 %v1452
    %1454 = vmatpush.bf16.msra.mxu0 %v1451
    %1455 = vmatpush.bf16.msra.mxu0 %v1450
    %1456 = vmatpush.bf16.msra.mxu0 %v1449
    %1457 = vmatpush.bf16.msra.mxu0 %v1448
    %1458 = vmatpush.bf16.msra.mxu0 %v1447
    %1459 = vmatpush.bf16.msra.mxu0 %v1446
    %1460 = vmatpush.bf16.msra.mxu0 %v1445
    %1461 = vmatmul.bf16.gmra.mxu0 %v412
    %v1462 = vpop.f32.mrf.mxu0
    %v1463 = vadd.f32 0.0, %v1462
    %v1464 = vpop.f32.mrf.mxu0
    %v1465 = vadd.f32 0.0, %v1464
    %1466 = vmatmul.bf16.gmra.mxu0 %v413
    %v1467 = vpop.f32.mrf.mxu0
    %v1468 = vadd.f32 0.0, %v1467
    %v1469 = vpop.f32.mrf.mxu0
    %v1470 = vadd.f32 0.0, %v1469
    %1471 = vmatmul.bf16.gmra.mxu0 %v414
    %v1472 = vpop.f32.mrf.mxu0
    %v1473 = vadd.f32 0.0, %v1472
    %v1474 = vpop.f32.mrf.mxu0
    %v1475 = vadd.f32 0.0, %v1474
    %1476 = vmatmul.bf16.gmra.mxu0 %v415
    %v1477 = vpop.f32.mrf.mxu0
    %v1478 = vadd.f32 0.0, %v1477
    %v1479 = vpop.f32.mrf.mxu0
    %v1480 = vadd.f32 0.0, %v1479
    %1481 = vmatmul.bf16.gmra.mxu0 %v416
    %v1482 = vpop.f32.mrf.mxu0
    %v1483 = vadd.f32 0.0, %v1482
    %v1484 = vpop.f32.mrf.mxu0
    %v1485 = vadd.f32 0.0, %v1484
    %1486 = vmatmul.bf16.gmra.mxu0 %v417
    %v1487 = vpop.f32.mrf.mxu0
    %v1488 = vadd.f32 0.0, %v1487
    %v1489 = vpop.f32.mrf.mxu0
    %v1490 = vadd.f32 0.0, %v1489
    %1491 = vmatmul.bf16.gmra.mxu0 %v418
    %v1492 = vpop.f32.mrf.mxu0
    %v1493 = vadd.f32 0.0, %v1492
    %v1494 = vpop.f32.mrf.mxu0
    %v1495 = vadd.f32 0.0, %v1494
    %1496 = vmatmul.bf16.gmra.mxu0 %v419
    %v1497 = vpop.f32.mrf.mxu0
    %v1498 = vadd.f32 0.0, %v1497
    %v1499 = vpop.f32.mrf.mxu0
    %v1500 = vadd.f32 0.0, %v1499
    %1501 = vdwg.mxu0
    %v1502 = vpack.c.bf16 %v1465, %v1463
    %v1503 = vpack.c.bf16 %v1470, %v1468
    %v1504 = vpack.c.bf16 %v1475, %v1473
    %v1505 = vpack.c.bf16 %v1480, %v1478
    %v1506 = vpack.c.bf16 %v1485, %v1483
    %v1507 = vpack.c.bf16 %v1490, %v1488
    %v1508 = vpack.c.bf16 %v1495, %v1493
    %v1509 = vpack.c.bf16 %v1500, %v1498
    %s1510 = scalar_lea.vmem [#allocation10], 192
    %v1511 = vld [vmem:[%s1510] sm:$0xf]
    %v1512 = vld [vmem:[%s1510 + $0x4] sm:$0xf]
    %v1513 = vld [vmem:[%s1510 + $0x8] sm:$0xf]
    %v1514 = vld [vmem:[%s1510 + $0xc] sm:$0xf]
    %v1515 = vld [vmem:[%s1510 + $0x10] sm:$0xf]
    %v1516 = vld [vmem:[%s1510 + $0x14] sm:$0xf]
    %v1517 = vld [vmem:[%s1510 + $0x18] sm:$0xf]
    %v1518 = vld [vmem:[%s1510 + $0x1c] sm:$0xf]
    %v1519 = vld [vmem:[%s1510 + $0x20] sm:$0xf]
    %v1520 = vld [vmem:[%s1510 + $0x24] sm:$0xf]
    %v1521 = vld [vmem:[%s1510 + $0x28] sm:$0xf]
    %v1522 = vld [vmem:[%s1510 + $0x2c] sm:$0xf]
    %v1523 = vld [vmem:[%s1510 + $0x30] sm:$0xf]
    %v1524 = vld [vmem:[%s1510 + $0x34] sm:$0xf]
    %v1525 = vld [vmem:[%s1510 + $0x38] sm:$0xf]
    %v1526 = vld [vmem:[%s1510 + $0x3c] sm:$0xf]
    %s1527 = scalar_lea.vmem %s5, 3
    %v1528 = vld [vmem:[%s1527] sm:$0x1]
    %v1530 = vperm.slane %v1528, 0
    %v1548 = vunpack.c.l.b16 %v1511
    %v1549 = vunpack.c.l.b16 %v1512
    %v1550 = vunpack.c.l.b16 %v1513
    %v1551 = vunpack.c.l.b16 %v1514
    %v1552 = vunpack.c.l.b16 %v1515
    %v1553 = vunpack.c.l.b16 %v1516
    %v1554 = vunpack.c.l.b16 %v1517
    %v1555 = vunpack.c.l.b16 %v1518
    %v1556 = vunpack.c.l.b16 %v1519
    %v1557 = vunpack.c.l.b16 %v1520
    %v1558 = vunpack.c.l.b16 %v1521
    %v1559 = vunpack.c.l.b16 %v1522
    %v1560 = vunpack.c.l.b16 %v1523
    %v1561 = vunpack.c.l.b16 %v1524
    %v1562 = vunpack.c.l.b16 %v1525
    %v1563 = vunpack.c.l.b16 %v1526
    %v1564 = vpack.c.b16 %v1549, %v1548
    %v1565 = vpack.c.b16 %v1551, %v1550
    %v1566 = vpack.c.b16 %v1553, %v1552
    %v1567 = vpack.c.b16 %v1555, %v1554
    %v1568 = vpack.c.b16 %v1557, %v1556
    %v1569 = vpack.c.b16 %v1559, %v1558
    %v1570 = vpack.c.b16 %v1561, %v1560
    %v1571 = vpack.c.b16 %v1563, %v1562
    %1580 = vmatpush.bf16.msra.mxu0 %v1571
    %1581 = vmatpush.bf16.msra.mxu0 %v1570
    %1582 = vmatpush.bf16.msra.mxu0 %v1569
    %1583 = vmatpush.bf16.msra.mxu0 %v1568
    %1584 = vmatpush.bf16.msra.mxu0 %v1567
    %1585 = vmatpush.bf16.msra.mxu0 %v1566
    %1586 = vmatpush.bf16.msra.mxu0 %v1565
    %1587 = vmatpush.bf16.msra.mxu0 %v1564
    %1588 = vmatmul.bf16.gmra.mxu0 %v1502
    %v1589 = vpop.f32.mrf.mxu0
    %v1590 = vadd.f32 %v1530, %v1589
    %v1591 = vpop.f32.mrf.mxu0
    %v1592 = vadd.f32 %v1530, %v1591
    %1593 = vmatmul.bf16.gmra.mxu0 %v1503
    %v1594 = vpop.f32.mrf.mxu0
    %v1595 = vadd.f32 %v1530, %v1594
    %v1596 = vpop.f32.mrf.mxu0
    %v1597 = vadd.f32 %v1530, %v1596
    %1598 = vmatmul.bf16.gmra.mxu0 %v1504
    %v1599 = vpop.f32.mrf.mxu0
    %v1600 = vadd.f32 %v1530, %v1599
    %v1601 = vpop.f32.mrf.mxu0
    %v1602 = vadd.f32 %v1530, %v1601
    %1603 = vmatmul.bf16.gmra.mxu0 %v1505
    %v1604 = vpop.f32.mrf.mxu0
    %v1605 = vadd.f32 %v1530, %v1604
    %v1606 = vpop.f32.mrf.mxu0
    %v1607 = vadd.f32 %v1530, %v1606
    %1608 = vmatmul.bf16.gmra.mxu0 %v1506
    %v1609 = vpop.f32.mrf.mxu0
    %v1610 = vadd.f32 %v1530, %v1609
    %v1611 = vpop.f32.mrf.mxu0
    %v1612 = vadd.f32 %v1530, %v1611
    %1613 = vmatmul.bf16.gmra.mxu0 %v1507
    %v1614 = vpop.f32.mrf.mxu0
    %v1615 = vadd.f32 %v1530, %v1614
    %v1616 = vpop.f32.mrf.mxu0
    %v1617 = vadd.f32 %v1530, %v1616
    %1618 = vmatmul.bf16.gmra.mxu0 %v1508
    %v1619 = vpop.f32.mrf.mxu0
    %v1620 = vadd.f32 %v1530, %v1619
    %v1621 = vpop.f32.mrf.mxu0
    %v1622 = vadd.f32 %v1530, %v1621
    %1623 = vmatmul.bf16.gmra.mxu0 %v1509
    %v1624 = vpop.f32.mrf.mxu0
    %v1625 = vadd.f32 %v1530, %v1624
    %v1626 = vpop.f32.mrf.mxu0
    %v1627 = vadd.f32 %v1530, %v1626
    %1628 = vdwg.mxu0
    %v1629 = vmax.f32 %v1590, 0.0
    %v1630 = vmax.f32 %v1592, 0.0
    %v1631 = vmax.f32 %v1595, 0.0
    %v1632 = vmax.f32 %v1597, 0.0
    %v1633 = vmax.f32 %v1600, 0.0
    %v1634 = vmax.f32 %v1602, 0.0
    %v1635 = vmax.f32 %v1605, 0.0
    %v1636 = vmax.f32 %v1607, 0.0
    %v1637 = vmax.f32 %v1610, 0.0
    %v1638 = vmax.f32 %v1612, 0.0
    %v1639 = vmax.f32 %v1615, 0.0
    %v1640 = vmax.f32 %v1617, 0.0
    %v1641 = vmax.f32 %v1620, 0.0
    %v1642 = vmax.f32 %v1622, 0.0
    %v1643 = vmax.f32 %v1625, 0.0
    %v1644 = vmax.f32 %v1627, 0.0
    %v1645 = vpack.c.bf16 %v1630, %v1629
    %v1646 = vpack.c.bf16 %v1632, %v1631
    %v1647 = vpack.c.bf16 %v1634, %v1633
    %v1648 = vpack.c.bf16 %v1636, %v1635
    %v1649 = vpack.c.bf16 %v1638, %v1637
    %v1650 = vpack.c.bf16 %v1640, %v1639
    %v1651 = vpack.c.bf16 %v1642, %v1641
    %v1652 = vpack.c.bf16 %v1644, %v1643
    %s1653 = scalar_lea.vmem [#allocation11], 192
    %v1654 = vld [vmem:[%s1653] sm:$0xf]
    %v1655 = vld [vmem:[%s1653 + $0x4] sm:$0xf]
    %v1656 = vld [vmem:[%s1653 + $0x8] sm:$0xf]
    %v1657 = vld [vmem:[%s1653 + $0xc] sm:$0xf]
    %v1658 = vld [vmem:[%s1653 + $0x10] sm:$0xf]
    %v1659 = vld [vmem:[%s1653 + $0x14] sm:$0xf]
    %v1660 = vld [vmem:[%s1653 + $0x18] sm:$0xf]
    %v1661 = vld [vmem:[%s1653 + $0x1c] sm:$0xf]
    %v1662 = vld [vmem:[%s1653 + $0x20] sm:$0xf]
    %v1663 = vld [vmem:[%s1653 + $0x24] sm:$0xf]
    %v1664 = vld [vmem:[%s1653 + $0x28] sm:$0xf]
    %v1665 = vld [vmem:[%s1653 + $0x2c] sm:$0xf]
    %v1666 = vld [vmem:[%s1653 + $0x30] sm:$0xf]
    %v1667 = vld [vmem:[%s1653 + $0x34] sm:$0xf]
    %v1668 = vld [vmem:[%s1653 + $0x38] sm:$0xf]
    %v1669 = vld [vmem:[%s1653 + $0x3c] sm:$0xf]
    %s1670 = scalar_lea.vmem [#allocation13], 3
    %v1671 = vld [vmem:[%s1670] sm:$0x1]
    %v1673 = vperm.slane %v1671, 0
    %v1691 = vunpack.c.l.b16 %v1654
    %v1692 = vunpack.c.l.b16 %v1655
    %v1693 = vunpack.c.l.b16 %v1656
    %v1694 = vunpack.c.l.b16 %v1657
    %v1695 = vunpack.c.l.b16 %v1658
    %v1696 = vunpack.c.l.b16 %v1659
    %v1697 = vunpack.c.l.b16 %v1660
    %v1698 = vunpack.c.l.b16 %v1661
    %v1699 = vunpack.c.l.b16 %v1662
    %v1700 = vunpack.c.l.b16 %v1663
    %v1701 = vunpack.c.l.b16 %v1664
    %v1702 = vunpack.c.l.b16 %v1665
    %v1703 = vunpack.c.l.b16 %v1666
    %v1704 = vunpack.c.l.b16 %v1667
    %v1705 = vunpack.c.l.b16 %v1668
    %v1706 = vunpack.c.l.b16 %v1669
    %v1707 = vpack.c.b16 %v1692, %v1691
    %v1708 = vpack.c.b16 %v1694, %v1693
    %v1709 = vpack.c.b16 %v1696, %v1695
    %v1710 = vpack.c.b16 %v1698, %v1697
    %v1711 = vpack.c.b16 %v1700, %v1699
    %v1712 = vpack.c.b16 %v1702, %v1701
    %v1713 = vpack.c.b16 %v1704, %v1703
    %v1714 = vpack.c.b16 %v1706, %v1705
    %1723 = vmatpush.bf16.msra.mxu0 %v1714
    %1724 = vmatpush.bf16.msra.mxu0 %v1713
    %1725 = vmatpush.bf16.msra.mxu0 %v1712
    %1726 = vmatpush.bf16.msra.mxu0 %v1711
    %1727 = vmatpush.bf16.msra.mxu0 %v1710
    %1728 = vmatpush.bf16.msra.mxu0 %v1709
    %1729 = vmatpush.bf16.msra.mxu0 %v1708
    %1730 = vmatpush.bf16.msra.mxu0 %v1707
    %1731 = vmatmul.bf16.gmra.mxu0 %v1645
    %v1732 = vpop.f32.mrf.mxu0
    %v1733 = vadd.f32 %v1673, %v1732
    %v1734 = vpop.f32.mrf.mxu0
    %v1735 = vadd.f32 %v1673, %v1734
    %1736 = vmatmul.bf16.gmra.mxu0 %v1646
    %v1737 = vpop.f32.mrf.mxu0
    %v1738 = vadd.f32 %v1673, %v1737
    %v1739 = vpop.f32.mrf.mxu0
    %v1740 = vadd.f32 %v1673, %v1739
    %1741 = vmatmul.bf16.gmra.mxu0 %v1647
    %v1742 = vpop.f32.mrf.mxu0
    %v1743 = vadd.f32 %v1673, %v1742
    %v1744 = vpop.f32.mrf.mxu0
    %v1745 = vadd.f32 %v1673, %v1744
    %1746 = vmatmul.bf16.gmra.mxu0 %v1648
    %v1747 = vpop.f32.mrf.mxu0
    %v1748 = vadd.f32 %v1673, %v1747
    %v1749 = vpop.f32.mrf.mxu0
    %v1750 = vadd.f32 %v1673, %v1749
    %1751 = vmatmul.bf16.gmra.mxu0 %v1649
    %v1752 = vpop.f32.mrf.mxu0
    %v1753 = vadd.f32 %v1673, %v1752
    %v1754 = vpop.f32.mrf.mxu0
    %v1755 = vadd.f32 %v1673, %v1754
    %1756 = vmatmul.bf16.gmra.mxu0 %v1650
    %v1757 = vpop.f32.mrf.mxu0
    %v1758 = vadd.f32 %v1673, %v1757
    %v1759 = vpop.f32.mrf.mxu0
    %v1760 = vadd.f32 %v1673, %v1759
    %1761 = vmatmul.bf16.gmra.mxu0 %v1651
    %v1762 = vpop.f32.mrf.mxu0
    %v1763 = vadd.f32 %v1673, %v1762
    %v1764 = vpop.f32.mrf.mxu0
    %v1765 = vadd.f32 %v1673, %v1764
    %1766 = vmatmul.bf16.gmra.mxu0 %v1652
    %v1767 = vpop.f32.mrf.mxu0
    %v1768 = vadd.f32 %v1673, %v1767
    %v1769 = vpop.f32.mrf.mxu0
    %v1770 = vadd.f32 %v1673, %v1769
    %1771 = vdwg.mxu0
    %v1772 = vmax.f32 %v1733, 0.0
    %v1773 = vmax.f32 %v1735, 0.0
    %v1774 = vmax.f32 %v1738, 0.0
    %v1775 = vmax.f32 %v1740, 0.0
    %v1776 = vmax.f32 %v1743, 0.0
    %v1777 = vmax.f32 %v1745, 0.0
    %v1778 = vmax.f32 %v1748, 0.0
    %v1779 = vmax.f32 %v1750, 0.0
    %v1780 = vmax.f32 %v1753, 0.0
    %v1781 = vmax.f32 %v1755, 0.0
    %v1782 = vmax.f32 %v1758, 0.0
    %v1783 = vmax.f32 %v1760, 0.0
    %v1784 = vmax.f32 %v1763, 0.0
    %v1785 = vmax.f32 %v1765, 0.0
    %v1786 = vmax.f32 %v1768, 0.0
    %v1787 = vmax.f32 %v1770, 0.0
    %v1788 = vpack.c.bf16 %v1773, %v1772
    %v1789 = vpack.c.bf16 %v1775, %v1774
    %v1790 = vpack.c.bf16 %v1777, %v1776
    %v1791 = vpack.c.bf16 %v1779, %v1778
    %v1792 = vpack.c.bf16 %v1781, %v1780
    %v1793 = vpack.c.bf16 %v1783, %v1782
    %v1794 = vpack.c.bf16 %v1785, %v1784
    %v1795 = vpack.c.bf16 %v1787, %v1786
    %v1796 = vld [vmem:[#allocation14] sm:$0xf]
    %1797 = vmatpush.bf16.msra.mxu0 %v1795
    %1798 = vmatpush.bf16.msra.mxu0 %v1794
    %1799 = vmatpush.bf16.msra.mxu0 %v1793
    %1800 = vmatpush.bf16.msra.mxu0 %v1792
    %1801 = vmatpush.bf16.msra.mxu0 %v1791
    %1802 = vmatpush.bf16.msra.mxu0 %v1790
    %1803 = vmatpush.bf16.msra.mxu0 %v1789
    %1804 = vmatpush.bf16.msra.mxu0 %v1788
    %1805 = vmatmul.bf16.gmra.mxu0 %v1796
    %v1806 = vpop.f32.mrf.mxu0
    %v1807 = vadd.f32 0.0, %v1806
    %v1808 = vpop.f32.mrf.mxu0
    %1809 = vdwg.mxu0
    %v1810 = vpack.c.bf16 %v1807, %v1807
    %v1811 = vld [vmem:[#allocation16] sm:$0xf]
    %v1812 = vld [vmem:[#allocation16 + $0x4] sm:$0xf]
    %v1813 = vld [vmem:[#allocation16 + $0x8] sm:$0xf]
    %v1814 = vld [vmem:[#allocation16 + $0xc] sm:$0xf]
    %v1815 = vld [vmem:[#allocation16 + $0x10] sm:$0xf]
    %v1816 = vld [vmem:[#allocation16 + $0x14] sm:$0xf]
    %v1817 = vld [vmem:[#allocation16 + $0x18] sm:$0xf]
    %v1818 = vld [vmem:[#allocation16 + $0x1c] sm:$0xf]
    %v1819 = vld [vmem:[#allocation16 + $0x20] sm:$0xf]
    %v1820 = vld [vmem:[#allocation16 + $0x24] sm:$0xf]
    %v1821 = vld [vmem:[#allocation16 + $0x28] sm:$0xf]
    %v1822 = vld [vmem:[#allocation16 + $0x2c] sm:$0xf]
    %v1823 = vld [vmem:[#allocation16 + $0x30] sm:$0xf]
    %v1824 = vld [vmem:[#allocation16 + $0x34] sm:$0xf]
    %v1825 = vld [vmem:[#allocation16 + $0x38] sm:$0xf]
    %v1826 = vld [vmem:[#allocation16 + $0x3c] sm:$0xf]
    %v1827 = vld [vmem:[%s10] sm:$0x1]
    %v1829 = vperm.slane %v1827, 0
    %v1847 = vunpack.c.l.b16 %v1811
    %v1848 = vunpack.c.l.b16 %v1812
    %v1849 = vunpack.c.l.b16 %v1813
    %v1850 = vunpack.c.l.b16 %v1814
    %v1851 = vunpack.c.l.b16 %v1815
    %v1852 = vunpack.c.l.b16 %v1816
    %v1853 = vunpack.c.l.b16 %v1817
    %v1854 = vunpack.c.l.b16 %v1818
    %v1855 = vunpack.c.l.b16 %v1819
    %v1856 = vunpack.c.l.b16 %v1820
    %v1857 = vunpack.c.l.b16 %v1821
    %v1858 = vunpack.c.l.b16 %v1822
    %v1859 = vunpack.c.l.b16 %v1823
    %v1860 = vunpack.c.l.b16 %v1824
    %v1861 = vunpack.c.l.b16 %v1825
    %v1862 = vunpack.c.l.b16 %v1826
    %v1863 = vpack.c.b16 %v1848, %v1847
    %v1864 = vpack.c.b16 %v1850, %v1849
    %v1865 = vpack.c.b16 %v1852, %v1851
    %v1866 = vpack.c.b16 %v1854, %v1853
    %v1867 = vpack.c.b16 %v1856, %v1855
    %v1868 = vpack.c.b16 %v1858, %v1857
    %v1869 = vpack.c.b16 %v1860, %v1859
    %v1870 = vpack.c.b16 %v1862, %v1861
    %1879 = vmatpush.bf16.msra.mxu0 %v1870
    %1880 = vmatpush.bf16.msra.mxu0 %v1869
    %1881 = vmatpush.bf16.msra.mxu0 %v1868
    %1882 = vmatpush.bf16.msra.mxu0 %v1867
    %1883 = vmatpush.bf16.msra.mxu0 %v1866
    %1884 = vmatpush.bf16.msra.mxu0 %v1865
    %1885 = vmatpush.bf16.msra.mxu0 %v1864
    %1886 = vmatpush.bf16.msra.mxu0 %v1863
    %1887 = vmatmul.bf16.gmra.mxu0 %v1810
    %v1888 = vpop.f32.mrf.mxu0
    %v1889 = vadd.f32 %v1829, %v1888
    %v1890 = vpop.f32.mrf.mxu0
    %1891 = vdwg.mxu0
    %1892 = vst [vmem:[#allocation17] sm:$0xff] %v1889
    // Predicated region
    $region82: #{tpu_custom_call.1} parent=1 // pred_check
      _
    $region83: #{tpu_custom_call.1} parent=1 // pred_check_branch
      %1894 = sbr.rel (0) target = $region85
    $region84: #{tpu_custom_call.1} parent=1 // pred_region
      %1896 = vsyncadd [#allocation4], 0
      %s1898 = sshll.u32 [#allocation17], 4
      %s1899 = int_to_ptr.vmem [resolvable:$true] %s1898
      %s1900 = sshll.u32 %s11, 4
      %s1901 = int_to_ptr.hbm [resolvable:$true] %s1900
      %1903 = dma.vmem_to_hbm [thread:$0]  %s1899, 128, %s1901, [#allocation4]
    $region85: #{tpu_custom_call.1} parent=1 // pred_fallthru
      _
    // Predicated region
    $region86: #{tpu_custom_call.1} parent=1 // pred_check
      _
    $region87: #{tpu_custom_call.1} parent=1 // pred_check_branch
      %1905 = sbr.rel (0) target = $region89
    $region88: #{tpu_custom_call.1} parent=1 // pred_region
      %1907 = dma.done [#allocation4], 128
    $region89: #{tpu_custom_call.1} parent=1 // pred_fallthru
      _
    %1908 = vsyncpa [#allocation3], 1
    %1909 = vsyncpa [#allocation6], 1
    %1910 = vsyncpa [#allocation9], 1
    %1911 = vsyncpa [#allocation12], 1
    %1912 = vsyncpa [#allocation15], 1
    %1913 = vsyncpa [#allocation4], 1

</llo_original>
